<compile_context>
chip_gen: v5e
topology: v5e:2x2
jax: 0.10.0
libtpu: 0.0.40
codegen_flags: <defaults>
</compile_context>

<pallas_src>
import functools

import jax
import jax.numpy as jnp
from jax import lax
from jax.experimental import pallas as pl
from jax.experimental.pallas import tpu as pltpu

EPS = 1e-5


# ---------------------------------------------------------------------------
# Fused Pallas kernel (one image per grid step)
# ---------------------------------------------------------------------------
def _make_kernel(cin, planes, h, w):
    wp = w + 2            # padded width (1 zero column each side)
    L = h * wp            # flattened output grid (2 garbage cols per row)
    S = (h + 3) * wp      # flattened padded input grid (1 extra zero tail row)

    def kernel(x_ref, w1_ref, w2_ref, b1_ref, b2_ref, mask_ref, o_ref, x2_ref):
        # x_ref   : (Cin, S)      bf16  zero-padded image, rows flattened
        # w1_ref  : (9, P, Cin)   bf16  conv1 weights, tap-major, BN1 scale folded
        # w2_ref  : (9, P, P)     f32   conv2 weights, tap-major, BN2 scale folded
        # b1_ref  : (P, 1)        f32   folded BN1 bias
        # b2_ref  : (P, 1)        f32   folded BN2 bias
        # mask_ref: (1, L)        f32   1.0 on valid width columns, 0.0 on garbage
        # o_ref   : (P, L)        f32   out2 on the flattened (H, W+2) grid
        # x2_ref  : (P, S)        f32   VMEM scratch: zero-padded conv2 input

        # ---- conv1 (+ folded BN1 scale): 9 shifted-slice matmul-accumulates ----
        acc1 = jnp.zeros((planes, L), jnp.float32)
        for ky in range(3):
            for kx in range(3):
                off = ky * wp + kx
                acc1 = acc1 + jnp.dot(w1_ref[3 * ky + kx],
                                      x_ref[:, off:off + L],
                                      preferred_element_type=jnp.float32)
        # + bias, relu, zero out the wrap-around (garbage) columns
        out1 = jnp.maximum(acc1 + b1_ref[...], 0.0) * mask_ref[...]

        # ---- build conv2's zero-padded input entirely in VMEM ----
        x2_ref[...] = jnp.zeros_like(x2_ref)
        x2_ref[:, wp + 1:wp + 1 + L] = out1

        # ---- conv2 (+ folded BN2 scale): 9 shifted-slice matmul-accumulates ----
        acc2 = jnp.zeros((planes, L), jnp.float32)
        for ky in range(3):
            for kx in range(3):
                off = ky * wp + kx
                acc2 = acc2 + jnp.dot(w2_ref[3 * ky + kx],
                                      x2_ref[:, off:off + L],
                                      preferred_element_type=jnp.float32)

        # + bias, + identity shortcut (a contiguous slice of the resident tile),
        # relu, lane-dense store
        shortcut = x_ref[:, wp + 1:wp + 1 + L].astype(jnp.float32)
        o_ref[...] = jnp.maximum(acc2 + b2_ref[...] + shortcut, 0.0)

    return kernel


# ---------------------------------------------------------------------------
# Wrapper: BN folding, layout plumbing, pallas_call
# ---------------------------------------------------------------------------
@jax.jit
def basic_block_forward(x_nchw, params):
    n, c, h, w = x_nchw.shape
    p = params["w1"].shape[0]
    assert params["w1"].shape == (p, c, 3, 3)
    assert params["w2"].shape == (p, p, 3, 3)
    assert c == p, "identity shortcut requires stride=1 and in_planes == planes"

    wp = w + 2
    L = h * wp
    S = (h + 3) * wp

    # ---- fold eval-mode BN: scale into the conv weights, bias kept separate ----
    s1 = params["gamma1"] / jnp.sqrt(params["var1"] + EPS)
    b1 = (params["beta1"] - params["mean1"] * s1).astype(jnp.float32).reshape(p, 1)
    s2 = params["gamma2"] / jnp.sqrt(params["var2"] + EPS)
    b2 = (params["beta2"] - params["mean2"] * s2).astype(jnp.float32).reshape(p, 1)

    def prep_w(wt, scale, dtype):
        wt = wt * scale[:, None, None, None]                 # fold BN scale (Cout)
        # (Cout, Cin, 3, 3) -> (9, Cout, Cin), tap-major (ky, kx)
        return jnp.transpose(wt, (2, 3, 0, 1)).reshape(
            9, wt.shape[0], wt.shape[1]).astype(dtype)

    w1m = prep_w(params["w1"], s1, jnp.bfloat16)   # HBM-read stream -> bf16
    w2m = prep_w(params["w2"], s2, jnp.float32)    # tiny; conv2 runs from VMEM

    # ---- input: NCHW, zero-pad spatially (extra bottom row for the shifted
    #      slices), flatten padded rows, cast dominant HBM stream to bf16 ----
    xp = jnp.pad(x_nchw.astype(jnp.float32), ((0, 0), (0, 0), (1, 2), (1, 1)))
    xf = xp.reshape(n, c, S).astype(jnp.bfloat16)

    # valid-column mask on the flattened (H, W+2) grid
    mask = (jnp.arange(L, dtype=jnp.int32) % wp < w).astype(jnp.float32).reshape(1, L)

    kernel = _make_kernel(c, p, h, w)

    flops = 2 * n * L * 9 * (c * p + p * p)
    bytes_accessed = (n * c * S * 2 + 9 * p * c * 2 + 9 * p * p * 4
                      + (2 * p + L) * 4 + n * p * L * 4)

    out_flat = pl.pallas_call(
        kernel,
        out_shape=jax.ShapeDtypeStruct((n, p, L), jnp.float32),
        grid=(n,),
        in_specs=[
            pl.BlockSpec((None, c, S), lambda i: (i, 0, 0)),   # per-image activations
            pl.BlockSpec((9, p, c), lambda i: (0, 0, 0)),      # w1 (resident)
            pl.BlockSpec((9, p, p), lambda i: (0, 0, 0)),      # w2 (resident)
            pl.BlockSpec((p, 1), lambda i: (0, 0)),            # bn1 bias
            pl.BlockSpec((p, 1), lambda i: (0, 0)),            # bn2 bias
            pl.BlockSpec((1, L), lambda i: (0, 0)),            # valid-column mask
        ],
        out_specs=pl.BlockSpec((None, p, L), lambda i: (i, 0, 0)),
        scratch_shapes=[pltpu.VMEM((p, S), jnp.float32)],
        compiler_params=pltpu.CompilerParams(
            dimension_semantics=("parallel",)),
        cost_estimate=pl.CostEstimate(flops=flops, transcendentals=0,
                                      bytes_accessed=bytes_accessed),
    )(xf, w1m, w2m, b1, b2, mask)

    # drop the 2 garbage columns of the flattened grid -> already NCHW
    return out_flat.reshape(n, p, h, wp)[:, :, :, :w]


# ---------------------------------------------------------------------------
# Pure-JAX reference (NCHW, mirrors the PyTorch module in eval mode)
# ---------------------------------------------------------------------------
@jax.jit
def reference_forward(x, params):
    def conv(inp, wt):
        return lax.conv_general_dilated(
            inp, wt, window_strides=(1, 1), padding=((1, 1), (1, 1)),
            dimension_numbers=("NCHW", "OIHW", "NCHW"))

    def bn(inp, g, b, m, v):
        g, b, m, v = (t[None, :, None, None] for t in (g, b, m, v))
        return (inp - m) / jnp.sqrt(v + EPS) * g + b

    out = jax.nn.relu(bn(conv(x, params["w1"]), params["gamma1"],
                         params["beta1"], params["mean1"], params["var1"]))
    out = bn(conv(out, params["w2"]), params["gamma2"],
             params["beta2"], params["mean2"], params["var2"])
    out = out + x  # identity shortcut
    return jax.nn.relu(out)


# ---------------------------------------------------------------------------
# Main
# ---------------------------------------------------------------------------
if __name__ == "__main__":
    # Small shapes consistent with the module: stride=1, in_planes == planes
    N, C, H, W = 2, 8, 16, 16
    planes = C

    key = jax.random.PRNGKey(0)
    keys = jax.random.split(key, 11)

    params = {
        # conv weights (Cout, Cin, 3, 3), bias=False
        "w1": 0.1 * jax.random.normal(keys[0], (planes, C, 3, 3), jnp.float32),
        "w2": 0.1 * jax.random.normal(keys[1], (planes, planes, 3, 3), jnp.float32),
        # bn1 affine + running stats
        "gamma1": 1.0 + 0.1 * jax.random.normal(keys[2], (planes,), jnp.float32),
        "beta1": 0.1 * jax.random.normal(keys[3], (planes,), jnp.float32),
        "mean1": 0.1 * jax.random.normal(keys[4], (planes,), jnp.float32),
        "var1": jax.random.uniform(keys[5], (planes,), jnp.float32, 0.5, 1.5),
        # bn2 affine + running stats
        "gamma2": 1.0 + 0.1 * jax.random.normal(keys[6], (planes,), jnp.float32),
        "beta2": 0.1 * jax.random.normal(keys[7], (planes,), jnp.float32),
        "mean2": 0.1 * jax.random.normal(keys[8], (planes,), jnp.float32),
        "var2": jax.random.uniform(keys[9], (planes,), jnp.float32, 0.75, 1.75),
    }

    x = jax.random.normal(keys[10], (N, C, H, W), jnp.float32)

    out = jax.block_until_ready(basic_block_forward(x, params))
    ref = jax.block_until_ready(reference_forward(x, params))

    assert out.shape == (N, planes, H, W), out.shape
    max_err = jnp.max(jnp.abs(out - ref))
    # bf16 activations with f32 accumulation -> looser tolerance than pure f32
    assert jnp.allclose(out, ref, rtol=5e-2, atol=5e-2), f"max abs err {max_err}"

    print("KERNEL_OK")
</pallas_src>

<mosaic_0001>
module attributes {stable_mosaic.version = 11 : i64} {
  func.func @kernel(%arg0: i32, %arg1: memref<1x8x342xbf16, #tpu.memory_space<vmem>>, %arg2: memref<9x8x8xbf16, #tpu.memory_space<vmem>>, %arg3: memref<9x8x8xf32, #tpu.memory_space<vmem>>, %arg4: memref<8x1xf32, #tpu.memory_space<vmem>>, %arg5: memref<8x1xf32, #tpu.memory_space<vmem>>, %arg6: memref<1x288xf32, #tpu.memory_space<vmem>>, %arg7: memref<1x8x288xf32, #tpu.memory_space<vmem>>, %arg8: memref<8x342xf32, #tpu.memory_space<vmem>>) attributes {dimension_semantics = [#tpu.dimension_semantics<parallel>], iteration_bounds = array<i64: 2>, scalar_prefetch = 0 : i64, scratch_operands = 1 : i64, tpu.core_type = #tpu.core_type<tc>, window_params = [{transform_indices = @transform_0, window_bounds = array<i64: 1, 8, 342>}, {pipeline_mode = #tpu.pipeline_mode<synchronous>, transform_indices = @transform_1, window_bounds = array<i64: 9, 8, 8>}, {pipeline_mode = #tpu.pipeline_mode<synchronous>, transform_indices = @transform_2, window_bounds = array<i64: 9, 8, 8>}, {pipeline_mode = #tpu.pipeline_mode<synchronous>, transform_indices = @transform_3, window_bounds = array<i64: 8, 1>}, {pipeline_mode = #tpu.pipeline_mode<synchronous>, transform_indices = @transform_4, window_bounds = array<i64: 8, 1>}, {pipeline_mode = #tpu.pipeline_mode<synchronous>, transform_indices = @transform_5, window_bounds = array<i64: 1, 288>}, {transform_indices = @transform_6, window_bounds = array<i64: 1, 8, 288>}]} {
    %cst = arith.constant 0.000000e+00 : f32
    %0 = vector.broadcast %cst : f32 to vector<8x288xf32>
    %c0 = arith.constant 0 : index
    %c0_0 = arith.constant 0 : index
    %c0_1 = arith.constant 0 : index
    %1 = vector.load %arg2[%c0, %c0_0, %c0_1] : memref<9x8x8xbf16, #tpu.memory_space<vmem>>, vector<1x8x8xbf16>
    %2 = vector.shape_cast %1 : vector<1x8x8xbf16> to vector<8x8xbf16>
    %c0_2 = arith.constant 0 : index
    %c0_3 = arith.constant 0 : index
    %c0_4 = arith.constant 0 : index
    %3 = vector.load %arg1[%c0_2, %c0_3, %c0_4] : memref<1x8x342xbf16, #tpu.memory_space<vmem>>, vector<1x8x288xbf16>
    %4 = vector.shape_cast %3 : vector<1x8x288xbf16> to vector<8x288xbf16>
    %cst_5 = arith.constant dense<0.000000e+00> : vector<8x288xf32>
    %5 = tpu.matmul %2, %4, %cst_5 {dimension_numbers = #tpu.dot_dimension_numbers<[1], [0], [0], [1], [0, 0, 1, 1], [], []>} : vector<8x8xbf16>, vector<8x288xbf16>, vector<8x288xf32> -> vector<8x288xf32>
    %6 = arith.addf %0, %5 : vector<8x288xf32>
    %c1 = arith.constant 1 : index
    %c0_6 = arith.constant 0 : index
    %c0_7 = arith.constant 0 : index
    %7 = vector.load %arg2[%c1, %c0_6, %c0_7] : memref<9x8x8xbf16, #tpu.memory_space<vmem>>, vector<1x8x8xbf16>
    %8 = vector.shape_cast %7 : vector<1x8x8xbf16> to vector<8x8xbf16>
    %c0_8 = arith.constant 0 : index
    %c0_9 = arith.constant 0 : index
    %c1_10 = arith.constant 1 : index
    %9 = vector.load %arg1[%c0_8, %c0_9, %c1_10] : memref<1x8x342xbf16, #tpu.memory_space<vmem>>, vector<1x8x288xbf16>
    %10 = vector.shape_cast %9 : vector<1x8x288xbf16> to vector<8x288xbf16>
    %cst_11 = arith.constant dense<0.000000e+00> : vector<8x288xf32>
    %11 = tpu.matmul %8, %10, %cst_11 {dimension_numbers = #tpu.dot_dimension_numbers<[1], [0], [0], [1], [0, 0, 1, 1], [], []>} : vector<8x8xbf16>, vector<8x288xbf16>, vector<8x288xf32> -> vector<8x288xf32>
    %12 = arith.addf %6, %11 : vector<8x288xf32>
    %c2 = arith.constant 2 : index
    %c0_12 = arith.constant 0 : index
    %c0_13 = arith.constant 0 : index
    %13 = vector.load %arg2[%c2, %c0_12, %c0_13] : memref<9x8x8xbf16, #tpu.memory_space<vmem>>, vector<1x8x8xbf16>
    %14 = vector.shape_cast %13 : vector<1x8x8xbf16> to vector<8x8xbf16>
    %c0_14 = arith.constant 0 : index
    %c0_15 = arith.constant 0 : index
    %c2_16 = arith.constant 2 : index
    %15 = vector.load %arg1[%c0_14, %c0_15, %c2_16] : memref<1x8x342xbf16, #tpu.memory_space<vmem>>, vector<1x8x288xbf16>
    %16 = vector.shape_cast %15 : vector<1x8x288xbf16> to vector<8x288xbf16>
    %cst_17 = arith.constant dense<0.000000e+00> : vector<8x288xf32>
    %17 = tpu.matmul %14, %16, %cst_17 {dimension_numbers = #tpu.dot_dimension_numbers<[1], [0], [0], [1], [0, 0, 1, 1], [], []>} : vector<8x8xbf16>, vector<8x288xbf16>, vector<8x288xf32> -> vector<8x288xf32>
    %18 = arith.addf %12, %17 : vector<8x288xf32>
    %c3 = arith.constant 3 : index
    %c0_18 = arith.constant 0 : index
    %c0_19 = arith.constant 0 : index
    %19 = vector.load %arg2[%c3, %c0_18, %c0_19] : memref<9x8x8xbf16, #tpu.memory_space<vmem>>, vector<1x8x8xbf16>
    %20 = vector.shape_cast %19 : vector<1x8x8xbf16> to vector<8x8xbf16>
    %c0_20 = arith.constant 0 : index
    %c0_21 = arith.constant 0 : index
    %c18 = arith.constant 18 : index
    %21 = vector.load %arg1[%c0_20, %c0_21, %c18] : memref<1x8x342xbf16, #tpu.memory_space<vmem>>, vector<1x8x288xbf16>
    %22 = vector.shape_cast %21 : vector<1x8x288xbf16> to vector<8x288xbf16>
    %cst_22 = arith.constant dense<0.000000e+00> : vector<8x288xf32>
    %23 = tpu.matmul %20, %22, %cst_22 {dimension_numbers = #tpu.dot_dimension_numbers<[1], [0], [0], [1], [0, 0, 1, 1], [], []>} : vector<8x8xbf16>, vector<8x288xbf16>, vector<8x288xf32> -> vector<8x288xf32>
    %24 = arith.addf %18, %23 : vector<8x288xf32>
    %c4 = arith.constant 4 : index
    %c0_23 = arith.constant 0 : index
    %c0_24 = arith.constant 0 : index
    %25 = vector.load %arg2[%c4, %c0_23, %c0_24] : memref<9x8x8xbf16, #tpu.memory_space<vmem>>, vector<1x8x8xbf16>
    %26 = vector.shape_cast %25 : vector<1x8x8xbf16> to vector<8x8xbf16>
    %c0_25 = arith.constant 0 : index
    %c0_26 = arith.constant 0 : index
    %c19 = arith.constant 19 : index
    %27 = vector.load %arg1[%c0_25, %c0_26, %c19] : memref<1x8x342xbf16, #tpu.memory_space<vmem>>, vector<1x8x288xbf16>
    %28 = vector.shape_cast %27 : vector<1x8x288xbf16> to vector<8x288xbf16>
    %cst_27 = arith.constant dense<0.000000e+00> : vector<8x288xf32>
    %29 = tpu.matmul %26, %28, %cst_27 {dimension_numbers = #tpu.dot_dimension_numbers<[1], [0], [0], [1], [0, 0, 1, 1], [], []>} : vector<8x8xbf16>, vector<8x288xbf16>, vector<8x288xf32> -> vector<8x288xf32>
    %30 = arith.addf %24, %29 : vector<8x288xf32>
    %c5 = arith.constant 5 : index
    %c0_28 = arith.constant 0 : index
    %c0_29 = arith.constant 0 : index
    %31 = vector.load %arg2[%c5, %c0_28, %c0_29] : memref<9x8x8xbf16, #tpu.memory_space<vmem>>, vector<1x8x8xbf16>
    %32 = vector.shape_cast %31 : vector<1x8x8xbf16> to vector<8x8xbf16>
    %c0_30 = arith.constant 0 : index
    %c0_31 = arith.constant 0 : index
    %c20 = arith.constant 20 : index
    %33 = vector.load %arg1[%c0_30, %c0_31, %c20] : memref<1x8x342xbf16, #tpu.memory_space<vmem>>, vector<1x8x288xbf16>
    %34 = vector.shape_cast %33 : vector<1x8x288xbf16> to vector<8x288xbf16>
    %cst_32 = arith.constant dense<0.000000e+00> : vector<8x288xf32>
    %35 = tpu.matmul %32, %34, %cst_32 {dimension_numbers = #tpu.dot_dimension_numbers<[1], [0], [0], [1], [0, 0, 1, 1], [], []>} : vector<8x8xbf16>, vector<8x288xbf16>, vector<8x288xf32> -> vector<8x288xf32>
    %36 = arith.addf %30, %35 : vector<8x288xf32>
    %c6 = arith.constant 6 : index
    %c0_33 = arith.constant 0 : index
    %c0_34 = arith.constant 0 : index
    %37 = vector.load %arg2[%c6, %c0_33, %c0_34] : memref<9x8x8xbf16, #tpu.memory_space<vmem>>, vector<1x8x8xbf16>
    %38 = vector.shape_cast %37 : vector<1x8x8xbf16> to vector<8x8xbf16>
    %c0_35 = arith.constant 0 : index
    %c0_36 = arith.constant 0 : index
    %c36 = arith.constant 36 : index
    %39 = vector.load %arg1[%c0_35, %c0_36, %c36] : memref<1x8x342xbf16, #tpu.memory_space<vmem>>, vector<1x8x288xbf16>
    %40 = vector.shape_cast %39 : vector<1x8x288xbf16> to vector<8x288xbf16>
    %cst_37 = arith.constant dense<0.000000e+00> : vector<8x288xf32>
    %41 = tpu.matmul %38, %40, %cst_37 {dimension_numbers = #tpu.dot_dimension_numbers<[1], [0], [0], [1], [0, 0, 1, 1], [], []>} : vector<8x8xbf16>, vector<8x288xbf16>, vector<8x288xf32> -> vector<8x288xf32>
    %42 = arith.addf %36, %41 : vector<8x288xf32>
    %c7 = arith.constant 7 : index
    %c0_38 = arith.constant 0 : index
    %c0_39 = arith.constant 0 : index
    %43 = vector.load %arg2[%c7, %c0_38, %c0_39] : memref<9x8x8xbf16, #tpu.memory_space<vmem>>, vector<1x8x8xbf16>
    %44 = vector.shape_cast %43 : vector<1x8x8xbf16> to vector<8x8xbf16>
    %c0_40 = arith.constant 0 : index
    %c0_41 = arith.constant 0 : index
    %c37 = arith.constant 37 : index
    %45 = vector.load %arg1[%c0_40, %c0_41, %c37] : memref<1x8x342xbf16, #tpu.memory_space<vmem>>, vector<1x8x288xbf16>
    %46 = vector.shape_cast %45 : vector<1x8x288xbf16> to vector<8x288xbf16>
    %cst_42 = arith.constant dense<0.000000e+00> : vector<8x288xf32>
    %47 = tpu.matmul %44, %46, %cst_42 {dimension_numbers = #tpu.dot_dimension_numbers<[1], [0], [0], [1], [0, 0, 1, 1], [], []>} : vector<8x8xbf16>, vector<8x288xbf16>, vector<8x288xf32> -> vector<8x288xf32>
    %48 = arith.addf %42, %47 : vector<8x288xf32>
    %c8 = arith.constant 8 : index
    %c0_43 = arith.constant 0 : index
    %c0_44 = arith.constant 0 : index
    %49 = vector.load %arg2[%c8, %c0_43, %c0_44] : memref<9x8x8xbf16, #tpu.memory_space<vmem>>, vector<1x8x8xbf16>
    %50 = vector.shape_cast %49 : vector<1x8x8xbf16> to vector<8x8xbf16>
    %c0_45 = arith.constant 0 : index
    %c0_46 = arith.constant 0 : index
    %c38 = arith.constant 38 : index
    %51 = vector.load %arg1[%c0_45, %c0_46, %c38] : memref<1x8x342xbf16, #tpu.memory_space<vmem>>, vector<1x8x288xbf16>
    %52 = vector.shape_cast %51 : vector<1x8x288xbf16> to vector<8x288xbf16>
    %cst_47 = arith.constant dense<0.000000e+00> : vector<8x288xf32>
    %53 = tpu.matmul %50, %52, %cst_47 {dimension_numbers = #tpu.dot_dimension_numbers<[1], [0], [0], [1], [0, 0, 1, 1], [], []>} : vector<8x8xbf16>, vector<8x288xbf16>, vector<8x288xf32> -> vector<8x288xf32>
    %54 = arith.addf %48, %53 : vector<8x288xf32>
    %c0_48 = arith.constant 0 : index
    %c0_49 = arith.constant 0 : index
    %55 = vector.load %arg4[%c0_48, %c0_49] : memref<8x1xf32, #tpu.memory_space<vmem>>, vector<8x1xf32>
    %56 = vector.broadcast %55 : vector<8x1xf32> to vector<8x288xf32>
    %57 = arith.addf %54, %56 : vector<8x288xf32>
    %cst_50 = arith.constant 0.000000e+00 : f32
    %58 = vector.broadcast %cst_50 : f32 to vector<8x288xf32>
    %59 = arith.maximumf %57, %58 : vector<8x288xf32>
    %c0_51 = arith.constant 0 : index
    %c0_52 = arith.constant 0 : index
    %60 = vector.load %arg6[%c0_51, %c0_52] : memref<1x288xf32, #tpu.memory_space<vmem>>, vector<1x288xf32>
    %61 = vector.broadcast %60 : vector<1x288xf32> to vector<8x288xf32>
    %62 = arith.mulf %59, %61 : vector<8x288xf32>
    %cst_53 = arith.constant 0.000000e+00 : f32
    %63 = vector.broadcast %cst_53 : f32 to vector<8x342xf32>
    %c0_54 = arith.constant 0 : index
    %c0_55 = arith.constant 0 : index
    %64 = vector.load %arg8[%c0_54, %c0_55] : memref<8x342xf32, #tpu.memory_space<vmem>>, vector<8x342xf32>
    tpu.vector_store %arg8[%c0_54, %c0_55], %63 {strides = array<i32>} : memref<8x342xf32, #tpu.memory_space<vmem>>, vector<8x342xf32>,
    %c0_56 = arith.constant 0 : index
    %c19_57 = arith.constant 19 : index
    %65 = vector.load %arg8[%c0_56, %c19_57] : memref<8x342xf32, #tpu.memory_space<vmem>>, vector<8x288xf32>
    tpu.vector_store %arg8[%c0_56, %c19_57], %62 {strides = array<i32>} : memref<8x342xf32, #tpu.memory_space<vmem>>, vector<8x288xf32>,
    %cst_58 = arith.constant 0.000000e+00 : f32
    %66 = vector.broadcast %cst_58 : f32 to vector<8x288xf32>
    %c0_59 = arith.constant 0 : index
    %c0_60 = arith.constant 0 : index
    %c0_61 = arith.constant 0 : index
    %67 = vector.load %arg3[%c0_59, %c0_60, %c0_61] : memref<9x8x8xf32, #tpu.memory_space<vmem>>, vector<1x8x8xf32>
    %68 = vector.shape_cast %67 : vector<1x8x8xf32> to vector<8x8xf32>
    %c0_62 = arith.constant 0 : index
    %c0_63 = arith.constant 0 : index
    %69 = vector.load %arg8[%c0_62, %c0_63] : memref<8x342xf32, #tpu.memory_space<vmem>>, vector<8x288xf32>
    %cst_64 = arith.constant dense<0.000000e+00> : vector<8x288xf32>
    %70 = tpu.matmul %68, %69, %cst_64 {dimension_numbers = #tpu.dot_dimension_numbers<[1], [0], [0], [1], [0, 0, 1, 1], [], []>} : vector<8x8xf32>, vector<8x288xf32>, vector<8x288xf32> -> vector<8x288xf32>
    %71 = arith.addf %66, %70 : vector<8x288xf32>
    %c1_65 = arith.constant 1 : index
    %c0_66 = arith.constant 0 : index
    %c0_67 = arith.constant 0 : index
    %72 = vector.load %arg3[%c1_65, %c0_66, %c0_67] : memref<9x8x8xf32, #tpu.memory_space<vmem>>, vector<1x8x8xf32>
    %73 = vector.shape_cast %72 : vector<1x8x8xf32> to vector<8x8xf32>
    %c0_68 = arith.constant 0 : index
    %c1_69 = arith.constant 1 : index
    %74 = vector.load %arg8[%c0_68, %c1_69] : memref<8x342xf32, #tpu.memory_space<vmem>>, vector<8x288xf32>
    %cst_70 = arith.constant dense<0.000000e+00> : vector<8x288xf32>
    %75 = tpu.matmul %73, %74, %cst_70 {dimension_numbers = #tpu.dot_dimension_numbers<[1], [0], [0], [1], [0, 0, 1, 1], [], []>} : vector<8x8xf32>, vector<8x288xf32>, vector<8x288xf32> -> vector<8x288xf32>
    %76 = arith.addf %71, %75 : vector<8x288xf32>
    %c2_71 = arith.constant 2 : index
    %c0_72 = arith.constant 0 : index
    %c0_73 = arith.constant 0 : index
    %77 = vector.load %arg3[%c2_71, %c0_72, %c0_73] : memref<9x8x8xf32, #tpu.memory_space<vmem>>, vector<1x8x8xf32>
    %78 = vector.shape_cast %77 : vector<1x8x8xf32> to vector<8x8xf32>
    %c0_74 = arith.constant 0 : index
    %c2_75 = arith.constant 2 : index
    %79 = vector.load %arg8[%c0_74, %c2_75] : memref<8x342xf32, #tpu.memory_space<vmem>>, vector<8x288xf32>
    %cst_76 = arith.constant dense<0.000000e+00> : vector<8x288xf32>
    %80 = tpu.matmul %78, %79, %cst_76 {dimension_numbers = #tpu.dot_dimension_numbers<[1], [0], [0], [1], [0, 0, 1, 1], [], []>} : vector<8x8xf32>, vector<8x288xf32>, vector<8x288xf32> -> vector<8x288xf32>
    %81 = arith.addf %76, %80 : vector<8x288xf32>
    %c3_77 = arith.constant 3 : index
    %c0_78 = arith.constant 0 : index
    %c0_79 = arith.constant 0 : index
    %82 = vector.load %arg3[%c3_77, %c0_78, %c0_79] : memref<9x8x8xf32, #tpu.memory_space<vmem>>, vector<1x8x8xf32>
    %83 = vector.shape_cast %82 : vector<1x8x8xf32> to vector<8x8xf32>
    %c0_80 = arith.constant 0 : index
    %c18_81 = arith.constant 18 : index
    %84 = vector.load %arg8[%c0_80, %c18_81] : memref<8x342xf32, #tpu.memory_space<vmem>>, vector<8x288xf32>
    %cst_82 = arith.constant dense<0.000000e+00> : vector<8x288xf32>
    %85 = tpu.matmul %83, %84, %cst_82 {dimension_numbers = #tpu.dot_dimension_numbers<[1], [0], [0], [1], [0, 0, 1, 1], [], []>} : vector<8x8xf32>, vector<8x288xf32>, vector<8x288xf32> -> vector<8x288xf32>
    %86 = arith.addf %81, %85 : vector<8x288xf32>
    %c4_83 = arith.constant 4 : index
    %c0_84 = arith.constant 0 : index
    %c0_85 = arith.constant 0 : index
    %87 = vector.load %arg3[%c4_83, %c0_84, %c0_85] : memref<9x8x8xf32, #tpu.memory_space<vmem>>, vector<1x8x8xf32>
    %88 = vector.shape_cast %87 : vector<1x8x8xf32> to vector<8x8xf32>
    %c0_86 = arith.constant 0 : index
    %c19_87 = arith.constant 19 : index
    %89 = vector.load %arg8[%c0_86, %c19_87] : memref<8x342xf32, #tpu.memory_space<vmem>>, vector<8x288xf32>
    %cst_88 = arith.constant dense<0.000000e+00> : vector<8x288xf32>
    %90 = tpu.matmul %88, %89, %cst_88 {dimension_numbers = #tpu.dot_dimension_numbers<[1], [0], [0], [1], [0, 0, 1, 1], [], []>} : vector<8x8xf32>, vector<8x288xf32>, vector<8x288xf32> -> vector<8x288xf32>
    %91 = arith.addf %86, %90 : vector<8x288xf32>
    %c5_89 = arith.constant 5 : index
    %c0_90 = arith.constant 0 : index
    %c0_91 = arith.constant 0 : index
    %92 = vector.load %arg3[%c5_89, %c0_90, %c0_91] : memref<9x8x8xf32, #tpu.memory_space<vmem>>, vector<1x8x8xf32>
    %93 = vector.shape_cast %92 : vector<1x8x8xf32> to vector<8x8xf32>
    %c0_92 = arith.constant 0 : index
    %c20_93 = arith.constant 20 : index
    %94 = vector.load %arg8[%c0_92, %c20_93] : memref<8x342xf32, #tpu.memory_space<vmem>>, vector<8x288xf32>
    %cst_94 = arith.constant dense<0.000000e+00> : vector<8x288xf32>
    %95 = tpu.matmul %93, %94, %cst_94 {dimension_numbers = #tpu.dot_dimension_numbers<[1], [0], [0], [1], [0, 0, 1, 1], [], []>} : vector<8x8xf32>, vector<8x288xf32>, vector<8x288xf32> -> vector<8x288xf32>
    %96 = arith.addf %91, %95 : vector<8x288xf32>
    %c6_95 = arith.constant 6 : index
    %c0_96 = arith.constant 0 : index
    %c0_97 = arith.constant 0 : index
    %97 = vector.load %arg3[%c6_95, %c0_96, %c0_97] : memref<9x8x8xf32, #tpu.memory_space<vmem>>, vector<1x8x8xf32>
    %98 = vector.shape_cast %97 : vector<1x8x8xf32> to vector<8x8xf32>
    %c0_98 = arith.constant 0 : index
    %c36_99 = arith.constant 36 : index
    %99 = vector.load %arg8[%c0_98, %c36_99] : memref<8x342xf32, #tpu.memory_space<vmem>>, vector<8x288xf32>
    %cst_100 = arith.constant dense<0.000000e+00> : vector<8x288xf32>
    %100 = tpu.matmul %98, %99, %cst_100 {dimension_numbers = #tpu.dot_dimension_numbers<[1], [0], [0], [1], [0, 0, 1, 1], [], []>} : vector<8x8xf32>, vector<8x288xf32>, vector<8x288xf32> -> vector<8x288xf32>
    %101 = arith.addf %96, %100 : vector<8x288xf32>
    %c7_101 = arith.constant 7 : index
    %c0_102 = arith.constant 0 : index
    %c0_103 = arith.constant 0 : index
    %102 = vector.load %arg3[%c7_101, %c0_102, %c0_103] : memref<9x8x8xf32, #tpu.memory_space<vmem>>, vector<1x8x8xf32>
    %103 = vector.shape_cast %102 : vector<1x8x8xf32> to vector<8x8xf32>
    %c0_104 = arith.constant 0 : index
    %c37_105 = arith.constant 37 : index
    %104 = vector.load %arg8[%c0_104, %c37_105] : memref<8x342xf32, #tpu.memory_space<vmem>>, vector<8x288xf32>
    %cst_106 = arith.constant dense<0.000000e+00> : vector<8x288xf32>
    %105 = tpu.matmul %103, %104, %cst_106 {dimension_numbers = #tpu.dot_dimension_numbers<[1], [0], [0], [1], [0, 0, 1, 1], [], []>} : vector<8x8xf32>, vector<8x288xf32>, vector<8x288xf32> -> vector<8x288xf32>
    %106 = arith.addf %101, %105 : vector<8x288xf32>
    %c8_107 = arith.constant 8 : index
    %c0_108 = arith.constant 0 : index
    %c0_109 = arith.constant 0 : index
    %107 = vector.load %arg3[%c8_107, %c0_108, %c0_109] : memref<9x8x8xf32, #tpu.memory_space<vmem>>, vector<1x8x8xf32>
    %108 = vector.shape_cast %107 : vector<1x8x8xf32> to vector<8x8xf32>
    %c0_110 = arith.constant 0 : index
    %c38_111 = arith.constant 38 : index
    %109 = vector.load %arg8[%c0_110, %c38_111] : memref<8x342xf32, #tpu.memory_space<vmem>>, vector<8x288xf32>
    %cst_112 = arith.constant dense<0.000000e+00> : vector<8x288xf32>
    %110 = tpu.matmul %108, %109, %cst_112 {dimension_numbers = #tpu.dot_dimension_numbers<[1], [0], [0], [1], [0, 0, 1, 1], [], []>} : vector<8x8xf32>, vector<8x288xf32>, vector<8x288xf32> -> vector<8x288xf32>
    %111 = arith.addf %106, %110 : vector<8x288xf32>
    %c0_113 = arith.constant 0 : index
    %c0_114 = arith.constant 0 : index
    %c19_115 = arith.constant 19 : index
    %112 = vector.load %arg1[%c0_113, %c0_114, %c19_115] : memref<1x8x342xbf16, #tpu.memory_space<vmem>>, vector<1x8x288xbf16>
    %113 = vector.shape_cast %112 : vector<1x8x288xbf16> to vector<8x288xbf16>
    %114 = arith.extf %113 : vector<8x288xbf16> to vector<8x288xf32>
    %c0_116 = arith.constant 0 : index
    %c0_117 = arith.constant 0 : index
    %115 = vector.load %arg5[%c0_116, %c0_117] : memref<8x1xf32, #tpu.memory_space<vmem>>, vector<8x1xf32>
    %116 = vector.broadcast %115 : vector<8x1xf32> to vector<8x288xf32>
    %117 = arith.addf %111, %116 : vector<8x288xf32>
    %118 = arith.addf %117, %114 : vector<8x288xf32>
    %cst_118 = arith.constant 0.000000e+00 : f32
    %119 = vector.broadcast %cst_118 : f32 to vector<8x288xf32>
    %120 = arith.maximumf %118, %119 : vector<8x288xf32>
    %c0_119 = arith.constant 0 : index
    %c0_120 = arith.constant 0 : index
    %c0_121 = arith.constant 0 : index
    %121 = vector.load %arg7[%c0_119, %c0_120, %c0_121] : memref<1x8x288xf32, #tpu.memory_space<vmem>>, vector<1x8x288xf32>
    %122 = vector.shape_cast %121 : vector<1x8x288xf32> to vector<8x288xf32>
    %123 = vector.shape_cast %120 : vector<8x288xf32> to vector<1x8x288xf32>
    tpu.vector_store %arg7[%c0_119, %c0_120, %c0_121], %123 {strides = array<i32>} : memref<1x8x288xf32, #tpu.memory_space<vmem>>, vector<1x8x288xf32>,
    return
  }
  func.func @transform_0(%arg0: i32) -> (i32, i32, i32) {
    %c0_i32 = arith.constant 0 : i32
    %c0_i32_0 = arith.constant 0 : i32
    %c0_i32_1 = arith.constant 0 : i32
    return %arg0, %c0_i32, %c0_i32_0 : i32, i32, i32
  }
  func.func @transform_1(%arg0: i32) -> (i32, i32, i32) {
    %c0_i32 = arith.constant 0 : i32
    %c0_i32_0 = arith.constant 0 : i32
    %c0_i32_1 = arith.constant 0 : i32
    %c0_i32_2 = arith.constant 0 : i32
    return %c0_i32, %c0_i32_0, %c0_i32_1 : i32, i32, i32
  }
  func.func @transform_2(%arg0: i32) -> (i32, i32, i32) {
    %c0_i32 = arith.constant 0 : i32
    %c0_i32_0 = arith.constant 0 : i32
    %c0_i32_1 = arith.constant 0 : i32
    %c0_i32_2 = arith.constant 0 : i32
    return %c0_i32, %c0_i32_0, %c0_i32_1 : i32, i32, i32
  }
  func.func @transform_3(%arg0: i32) -> (i32, i32) {
    %c0_i32 = arith.constant 0 : i32
    %c0_i32_0 = arith.constant 0 : i32
    %c0_i32_1 = arith.constant 0 : i32
    return %c0_i32, %c0_i32_0 : i32, i32
  }
  func.func @transform_4(%arg0: i32) -> (i32, i32) {
    %c0_i32 = arith.constant 0 : i32
    %c0_i32_0 = arith.constant 0 : i32
    %c0_i32_1 = arith.constant 0 : i32
    return %c0_i32, %c0_i32_0 : i32, i32
  }
  func.func @transform_5(%arg0: i32) -> (i32, i32) {
    %c0_i32 = arith.constant 0 : i32
    %c0_i32_0 = arith.constant 0 : i32
    %c0_i32_1 = arith.constant 0 : i32
    return %c0_i32, %c0_i32_0 : i32, i32
  }
  func.func @transform_6(%arg0: i32) -> (i32, i32, i32) {
    %c0_i32 = arith.constant 0 : i32
    %c0_i32_0 = arith.constant 0 : i32
    %c0_i32_1 = arith.constant 0 : i32
    return %arg0, %c0_i32, %c0_i32_0 : i32, i32, i32
  }
}

</mosaic_0001>

<llo_original>
// kernel: basic_block_forward.1
$region0: #{basic_block_forward.1}
  #allocation0 [shape = 'u32[]', space=smem, size = 0x4, offset = 0x4, fixed_abs, tag = 'smem constant byte address 0x4 - core index']
  #allocation1 [shape = 'u32[72,128]{1,0:T(1,128)}', space=vmem, size = 0x9000, scoped, tag = 'internal scratch']
  #allocation2 [shape = 'f32[8,342]{1,0:T(8,128)}', space=vmem, size = 0x3000, scoped, tag = 'scratch operand']
  %s0 = inlined_call_operand.vmem [shape: bf16[2,8,342], index: 0, kind: input, shape index: {}]
  %s1 = inlined_call_operand.vmem [shape: bf16[9,8,8], index: 1, kind: input, shape index: {}]
  %s2 = inlined_call_operand.vmem [shape: f32[9,8,8], index: 2, kind: input, shape index: {}]
  %s3 = inlined_call_operand.vmem [shape: f32[8,1], index: 3, kind: input, shape index: {}]
  %s4 = inlined_call_operand.vmem [shape: f32[8,1], index: 4, kind: input, shape index: {}]
  %s5 = inlined_call_operand.vmem [shape: f32[1,288], index: 5, kind: input, shape index: {}]
  %s6 = inlined_call_operand.vmem [shape: f32[2,8,288], index: 6, kind: output, shape index: {}]
  %s7 = sld [smem:[#allocation0]]
  $region57: #{basic_block_forward.1} parent=0
    _
  %s9 = ssub.s32 1, %s7
  %s10 = scalar_select 0, %s9, %s7
  loop: start=0, step=1, limit=4
  $region2: #{basic_block_forward.1} parent=0 // loop_pre_header
    _
  $region3: #{basic_block_forward.1} parent=0 // loop_header
    %s12 = sphi 0, %s16
    %p13 = scmp.ge.s32.totalorder %s12, 4
    %s22 = sphi 0, %s24
    %s25 = sphi 0, %s22
    %s26 = sphi 0, %s25
    %s42 = sphi 0, %s26
    %s46 = sphi 0, %s46
    %s48 = sphi 0, %s46
    %s49 = sphi 0, %s48
    %s63 = sphi 0, %s49
    %s67 = sphi 0, %s67
    %s69 = sphi 0, %s67
    %s70 = sphi 0, %s69
    %s84 = sphi 0, %s70
    %s88 = sphi 0, %s88
    %s90 = sphi 0, %s88
    %s91 = sphi 0, %s90
    %s105 = sphi 0, %s91
    %s109 = sphi 0, %s109
    %s111 = sphi 0, %s109
    %s112 = sphi 0, %s111
    %s126 = sphi 0, %s112
    %s130 = sphi 0, %s130
    %s132 = sphi 0, %s130
    %s133 = sphi 0, %s132
    %s147 = sphi 0, %s133
    %s153 = sphi 0, %s155
    %s156 = sphi 0, %s153
    %s157 = sphi 0, %s156
    %s173 = sphi 0, %s157
  $region4: #{basic_block_forward.1} parent=0 // loop_header_branch
    %15 = sbr.rel (%p13) target = $region8
  $region5: #{basic_block_forward.1} parent=0 // loop_body
    %s17 = ssub.s32 %s12, 1
    %s18 = ssub.s32 %s12, 2
    %s19 = sadd.s32 %s12, 1
    %s20 = ssub.s32 %s12, %s19
    %p21 = scmp.eq.s32.totalorder %s20, 0
    %s23 = sadd.s32 %s22, 1
    %s24 = scalar_select %p21, %s22, %s23
    %p27 = pneg %p21
    %p28 = scmp.eq.s32.totalorder %s12, 1
    %p29 = por %p27, %p28
    %p30 = scmp.ne.s32.totalorder %s22, %s25
    %p31 = scmp.eq.s32.totalorder %s12, 0
    %p32 = por %p30, %p31
    %p33 = scmp.ne.s32.totalorder %s22, %s25
    %p34 = scmp.eq.s32.totalorder %s17, 1
    %p35 = por %p33, %p34
    %p36 = scmp.ne.s32.totalorder %s25, %s26
    %p37 = scmp.eq.s32.totalorder %s17, 0
    %p38 = por %p36, %p37
    %p39 = scmp.ne.s32.totalorder %s25, %s26
    %p40 = scmp.eq.s32.totalorder %s18, 1
    %p41 = por %p39, %p40
    %p43 = scmp.ne.s32.totalorder %s26, %s42
    %p44 = scmp.eq.s32.totalorder %s18, 0
    %p45 = por %p43, %p44
    %s47 = sadd.s32 %s46, 1
    %p50 = scmp.eq.s32.totalorder %s12, 1
    %p51 = scmp.ne.s32.totalorder %s46, %s48
    %p52 = scmp.eq.s32.totalorder %s12, 0
    %p53 = por %p51, %p52
    %p54 = scmp.ne.s32.totalorder %s46, %s48
    %p55 = scmp.eq.s32.totalorder %s17, 1
    %p56 = por %p54, %p55
    %p57 = scmp.ne.s32.totalorder %s48, %s49
    %p58 = scmp.eq.s32.totalorder %s17, 0
    %p59 = por %p57, %p58
    %p60 = scmp.ne.s32.totalorder %s48, %s49
    %p61 = scmp.eq.s32.totalorder %s18, 1
    %p62 = por %p60, %p61
    %p64 = scmp.ne.s32.totalorder %s49, %s63
    %p65 = scmp.eq.s32.totalorder %s18, 0
    %p66 = por %p64, %p65
    %s68 = sadd.s32 %s67, 1
    %p71 = scmp.eq.s32.totalorder %s12, 1
    %p72 = scmp.ne.s32.totalorder %s67, %s69
    %p73 = scmp.eq.s32.totalorder %s12, 0
    %p74 = por %p72, %p73
    %p75 = scmp.ne.s32.totalorder %s67, %s69
    %p76 = scmp.eq.s32.totalorder %s17, 1
    %p77 = por %p75, %p76
    %p78 = scmp.ne.s32.totalorder %s69, %s70
    %p79 = scmp.eq.s32.totalorder %s17, 0
    %p80 = por %p78, %p79
    %p81 = scmp.ne.s32.totalorder %s69, %s70
    %p82 = scmp.eq.s32.totalorder %s18, 1
    %p83 = por %p81, %p82
    %p85 = scmp.ne.s32.totalorder %s70, %s84
    %p86 = scmp.eq.s32.totalorder %s18, 0
    %p87 = por %p85, %p86
    %s89 = sadd.s32 %s88, 1
    %p92 = scmp.eq.s32.totalorder %s12, 1
    %p93 = scmp.ne.s32.totalorder %s88, %s90
    %p94 = scmp.eq.s32.totalorder %s12, 0
    %p95 = por %p93, %p94
    %p96 = scmp.ne.s32.totalorder %s88, %s90
    %p97 = scmp.eq.s32.totalorder %s17, 1
    %p98 = por %p96, %p97
    %p99 = scmp.ne.s32.totalorder %s90, %s91
    %p100 = scmp.eq.s32.totalorder %s17, 0
    %p101 = por %p99, %p100
    %p102 = scmp.ne.s32.totalorder %s90, %s91
    %p103 = scmp.eq.s32.totalorder %s18, 1
    %p104 = por %p102, %p103
    %p106 = scmp.ne.s32.totalorder %s91, %s105
    %p107 = scmp.eq.s32.totalorder %s18, 0
    %p108 = por %p106, %p107
    %s110 = sadd.s32 %s109, 1
    %p113 = scmp.eq.s32.totalorder %s12, 1
    %p114 = scmp.ne.s32.totalorder %s109, %s111
    %p115 = scmp.eq.s32.totalorder %s12, 0
    %p116 = por %p114, %p115
    %p117 = scmp.ne.s32.totalorder %s109, %s111
    %p118 = scmp.eq.s32.totalorder %s17, 1
    %p119 = por %p117, %p118
    %p120 = scmp.ne.s32.totalorder %s111, %s112
    %p121 = scmp.eq.s32.totalorder %s17, 0
    %p122 = por %p120, %p121
    %p123 = scmp.ne.s32.totalorder %s111, %s112
    %p124 = scmp.eq.s32.totalorder %s18, 1
    %p125 = por %p123, %p124
    %p127 = scmp.ne.s32.totalorder %s112, %s126
    %p128 = scmp.eq.s32.totalorder %s18, 0
    %p129 = por %p127, %p128
    %s131 = sadd.s32 %s130, 1
    %p134 = scmp.eq.s32.totalorder %s12, 1
    %p135 = scmp.ne.s32.totalorder %s130, %s132
    %p136 = scmp.eq.s32.totalorder %s12, 0
    %p137 = por %p135, %p136
    %p138 = scmp.ne.s32.totalorder %s130, %s132
    %p139 = scmp.eq.s32.totalorder %s17, 1
    %p140 = por %p138, %p139
    %p141 = scmp.ne.s32.totalorder %s132, %s133
    %p142 = scmp.eq.s32.totalorder %s17, 0
    %p143 = por %p141, %p142
    %p144 = scmp.ne.s32.totalorder %s132, %s133
    %p145 = scmp.eq.s32.totalorder %s18, 1
    %p146 = por %p144, %p145
    %p148 = scmp.ne.s32.totalorder %s133, %s147
    %p149 = scmp.eq.s32.totalorder %s18, 0
    %p150 = por %p148, %p149
    %s151 = ssub.s32 %s12, %s19
    %p152 = scmp.eq.s32.totalorder %s151, 0
    %s154 = sadd.s32 %s153, 1
    %s155 = scalar_select %p152, %s153, %s154
    %p158 = pneg %p152
    %p159 = scmp.eq.s32.totalorder %s12, 1
    %p160 = por %p158, %p159
    %p161 = scmp.ne.s32.totalorder %s153, %s156
    %p162 = scmp.eq.s32.totalorder %s12, 0
    %p163 = por %p161, %p162
    %p164 = scmp.ne.s32.totalorder %s153, %s156
    %p165 = scmp.eq.s32.totalorder %s17, 1
    %p166 = por %p164, %p165
    %p167 = scmp.ne.s32.totalorder %s156, %s157
    %p168 = scmp.eq.s32.totalorder %s17, 0
    %p169 = por %p167, %p168
    %p170 = scmp.ne.s32.totalorder %s156, %s157
    %p171 = scmp.eq.s32.totalorder %s18, 1
    %p172 = por %p170, %p171
    %p174 = scmp.ne.s32.totalorder %s157, %s173
    %p175 = scmp.eq.s32.totalorder %s18, 0
    %p176 = por %p174, %p175
    %p177 = scmp.le.s32.totalorder 1, %s12
    %p178 = scmp.lt.s32.totalorder %s12, 3
    %p179 = pnand %p177, %p178
    %p180 = pneg %p179
    // Predicated region
    $region9: #{basic_block_forward.1} parent=5 // pred_check
      _
    $region10: #{basic_block_forward.1} parent=5 // pred_check_branch
      %182 = sbr.rel (%p179) target = $region12
    $region11: #{basic_block_forward.1} parent=5 // pred_region
      %s183 = ssub.s32 %s12, 1
      // Predicated region
      $region13: #{basic_block_forward.1} parent=11 // pred_check
        %p184 = pneg %p59
      $region14: #{basic_block_forward.1} parent=11 // pred_check_branch
        %186 = sbr.rel (%p184) target = $region16
      $region15: #{basic_block_forward.1} parent=11 // pred_region
        _
      $region16: #{basic_block_forward.1} parent=11 // pred_fallthru
        _
      // Predicated region
      $region17: #{basic_block_forward.1} parent=11 // pred_check
        %p187 = pneg %p80
      $region18: #{basic_block_forward.1} parent=11 // pred_check_branch
        %189 = sbr.rel (%p187) target = $region20
      $region19: #{basic_block_forward.1} parent=11 // pred_region
        _
      $region20: #{basic_block_forward.1} parent=11 // pred_fallthru
        _
      // Predicated region
      $region21: #{basic_block_forward.1} parent=11 // pred_check
        %p190 = pneg %p101
      $region22: #{basic_block_forward.1} parent=11 // pred_check_branch
        %192 = sbr.rel (%p190) target = $region24
      $region23: #{basic_block_forward.1} parent=11 // pred_region
        _
      $region24: #{basic_block_forward.1} parent=11 // pred_fallthru
        _
      // Predicated region
      $region25: #{basic_block_forward.1} parent=11 // pred_check
        %p193 = pneg %p122
      $region26: #{basic_block_forward.1} parent=11 // pred_check_branch
        %195 = sbr.rel (%p193) target = $region28
      $region27: #{basic_block_forward.1} parent=11 // pred_region
        _
      $region28: #{basic_block_forward.1} parent=11 // pred_fallthru
        _
      // Predicated region
      $region29: #{basic_block_forward.1} parent=11 // pred_check
        %p196 = pneg %p143
      $region30: #{basic_block_forward.1} parent=11 // pred_check_branch
        %198 = sbr.rel (%p196) target = $region32
      $region31: #{basic_block_forward.1} parent=11 // pred_region
        _
      $region32: #{basic_block_forward.1} parent=11 // pred_fallthru
        _
    $region12: #{basic_block_forward.1} parent=5 // pred_fallthru
      _
    %p199 = scmp.lt.s32.totalorder %s12, 2
    // Predicated region
    $region33: #{basic_block_forward.1} parent=5 // pred_check
      %p200 = pneg %p199
    $region34: #{basic_block_forward.1} parent=5 // pred_check_branch
      %202 = sbr.rel (%p200) target = $region36
    $region35: #{basic_block_forward.1} parent=5 // pred_region
      // Predicated region
      $region37: #{basic_block_forward.1} parent=35 // pred_check
        %p203 = pneg %p32
      $region38: #{basic_block_forward.1} parent=35 // pred_check_branch
        %205 = sbr.rel (%p203) target = $region40
      $region39: #{basic_block_forward.1} parent=35 // pred_region
        %p206 = scmp.lt.s32.totalorder %s12, 1
        %s207 = scalar_select %p206, %s12, 1
        %s208 = smul.addr %s207, 3
        %s209 = smul.addr %s208, 4
        %s210 = scalar_lea.vmem %s0, %s209
      $region40: #{basic_block_forward.1} parent=35 // pred_fallthru
        _
    $region36: #{basic_block_forward.1} parent=5 // pred_fallthru
      _
    %p211 = scmp.le.s32.totalorder 1, %s12
    %p212 = scmp.lt.s32.totalorder %s12, 3
    %p213 = pnand %p211, %p212
    %p214 = pneg %p213
    // Predicated region
    $region41: #{basic_block_forward.1} parent=5 // pred_check
      _
    $region42: #{basic_block_forward.1} parent=5 // pred_check_branch
      %216 = sbr.rel (%p213) target = $region44
    $region43: #{basic_block_forward.1} parent=5 // pred_region
      %s217 = ssub.s32 %s12, 1
      %p218 = scmp.lt.s32.totalorder %s17, 1
      %s219 = scalar_select %p218, %s17, 1
      %s220 = smul.addr %s219, 3
      %s221 = smul.addr %s220, 4
      %s222 = scalar_lea.vmem %s0, %s221
      %p223 = pneg %p38
      %p224 = pneg %p35
      %p225 = pneg %p59
      %p226 = pneg %p56
      %p227 = pneg %p80
      %p228 = pneg %p77
      %p229 = pneg %p101
      %p230 = pneg %p98
      %p231 = pneg %p122
      %p232 = pneg %p119
      %p233 = pneg %p143
      %p234 = pneg %p140
      %p235 = pneg %p169
      %p236 = pneg %p166
      %p237 = scmp.lt.s32.totalorder %s17, 1
      %s238 = scalar_select %p237, %s17, 1
      %s239 = smul.addr %s238, 3
      %s240 = smul.addr %s239, 8
      %s241 = scalar_lea.vmem %s6, %s240
      %p242 = scmp.lt.s32.totalorder %s17, 1
      %s243 = scalar_select %p242, %s17, 1
      %s244 = smul.addr %s243, 3
      %s245 = smul.addr %s244, 4
      %s246 = scalar_lea.vmem %s0, %s245
      %p247 = scmp.lt.s32.totalorder %s17, 1
      %s248 = scalar_select %p247, %s17, 1
      %s249 = smul.addr %s248, 3
      %s250 = smul.addr %s249, 8
      %s251 = scalar_lea.vmem %s6, %s250
      %v253 = vld [vmem:[%s1] sm:$0xf]
      %v254 = vld [vmem:[%s246] sm:$0xff]
      %v255 = vld [vmem:[%s246 + $0x8] sm:$0xf]
      %s256 = scalar_lea.vmem %s1, 4
      %v257 = vld [vmem:[%s256] sm:$0xf]
      %v260 = vunpack.c.l.b16 %v254
      %v261 = vunpack.c.h.b16 %v254
      %v262 = vunpack.c.l.b16 %v255
      %v263 = vpack.c.b16 %v260, %v260
      %v264 = vpack.c.b16 %v261, %v261
      %v265 = vpack.c.b16 %v262, %v262
      %266 = vrot.lane.b32.xlu0 %v263, 127
      %v267 = vpop.permute.xlu0 %266
      %268 = vrot.lane.b32.xlu0 %v264, 127
      %v269 = vpop.permute.xlu0 %268
      %270 = vrot.lane.b32.xlu0 %v265, 127
      %v271 = vpop.permute.xlu0 %270
      %vm272 = vcmask 1039360
      %v273 = vsel %vm272, %v267, %v269
      %v274 = vsel %vm272, %v269, %v271
      %vm275 = vcmask 64512
      %v277 = vsel %vm275, %v257, 0
      %vm279 = vcmask 1043456
      %v281 = vsel %vm279, %v273, 0
      %v284 = vsel %vm279, %v274, 0
      %v287 = vsel %vm279, %v271, 0
      %289 = vmatpush.bf16.msra.mxu0 0
      %290 = vmatpush.bf16.msra.mxu0 0
      %291 = vmatpush.bf16.msra.mxu0 0
      %292 = vmatpush.bf16.msra.mxu0 0
      %293 = vmatpush.bf16.msra.mxu0 0
      %294 = vmatpush.bf16.msra.mxu0 0
      %295 = vmatpush.bf16.msra.mxu0 0
      %296 = vmatpush.bf16.msra.mxu0 %v281
      %297 = vmatmul.bf16.gmra.mxu0 %v277
      %v298 = vpop.f32.mrf.mxu0
      %v299 = vadd.f32 0.0, %v298
      %v300 = vpop.f32.mrf.mxu0
      %301 = vdwg.mxu0
      %302 = vmatpush.bf16.msra.mxu0 0
      %303 = vmatpush.bf16.msra.mxu0 0
      %304 = vmatpush.bf16.msra.mxu0 0
      %305 = vmatpush.bf16.msra.mxu0 0
      %306 = vmatpush.bf16.msra.mxu0 0
      %307 = vmatpush.bf16.msra.mxu0 0
      %308 = vmatpush.bf16.msra.mxu0 0
      %309 = vmatpush.bf16.msra.mxu0 %v284
      %310 = vmatmul.bf16.gmra.mxu0 %v277
      %v311 = vpop.f32.mrf.mxu0
      %v312 = vadd.f32 0.0, %v311
      %v313 = vpop.f32.mrf.mxu0
      %314 = vdwg.mxu0
      %315 = vmatpush.bf16.msra.mxu0 0
      %316 = vmatpush.bf16.msra.mxu0 0
      %317 = vmatpush.bf16.msra.mxu0 0
      %318 = vmatpush.bf16.msra.mxu0 0
      %319 = vmatpush.bf16.msra.mxu0 0
      %320 = vmatpush.bf16.msra.mxu0 0
      %321 = vmatpush.bf16.msra.mxu0 0
      %322 = vmatpush.bf16.msra.mxu0 %v287
      %323 = vmatmul.bf16.gmra.mxu0 %v277
      %v324 = vpop.f32.mrf.mxu0
      %v325 = vadd.f32 0.0, %v324
      %v326 = vpop.f32.mrf.mxu0
      %327 = vdwg.mxu0
      %v329 = vsel %vm275, %v253, 0
      %v332 = vsel %vm279, %v263, 0
      %v335 = vsel %vm279, %v264, 0
      %v338 = vsel %vm279, %v265, 0
      %340 = vmatpush.bf16.msra.mxu0 0
      %341 = vmatpush.bf16.msra.mxu0 0
      %342 = vmatpush.bf16.msra.mxu0 0
      %343 = vmatpush.bf16.msra.mxu0 0
      %344 = vmatpush.bf16.msra.mxu0 0
      %345 = vmatpush.bf16.msra.mxu0 0
      %346 = vmatpush.bf16.msra.mxu0 0
      %347 = vmatpush.bf16.msra.mxu0 %v332
      %348 = vmatmul.bf16.gmra.mxu0 %v329
      %v349 = vpop.f32.mrf.mxu0
      %v350 = vadd.f32 %v299, %v349
      %v351 = vpop.f32.mrf.mxu0
      %352 = vdwg.mxu0
      %353 = vmatpush.bf16.msra.mxu0 0
      %354 = vmatpush.bf16.msra.mxu0 0
      %355 = vmatpush.bf16.msra.mxu0 0
      %356 = vmatpush.bf16.msra.mxu0 0
      %357 = vmatpush.bf16.msra.mxu0 0
      %358 = vmatpush.bf16.msra.mxu0 0
      %359 = vmatpush.bf16.msra.mxu0 0
      %360 = vmatpush.bf16.msra.mxu0 %v335
      %361 = vmatmul.bf16.gmra.mxu0 %v329
      %v362 = vpop.f32.mrf.mxu0
      %v363 = vadd.f32 %v312, %v362
      %v364 = vpop.f32.mrf.mxu0
      %365 = vdwg.mxu0
      %366 = vmatpush.bf16.msra.mxu0 0
      %367 = vmatpush.bf16.msra.mxu0 0
      %368 = vmatpush.bf16.msra.mxu0 0
      %369 = vmatpush.bf16.msra.mxu0 0
      %370 = vmatpush.bf16.msra.mxu0 0
      %371 = vmatpush.bf16.msra.mxu0 0
      %372 = vmatpush.bf16.msra.mxu0 0
      %373 = vmatpush.bf16.msra.mxu0 %v338
      %374 = vmatmul.bf16.gmra.mxu0 %v329
      %v375 = vpop.f32.mrf.mxu0
      %v376 = vadd.f32 %v325, %v375
      %v377 = vpop.f32.mrf.mxu0
      %378 = vdwg.mxu0
      %s379 = scalar_lea.vmem %s1, 8
      %v380 = vld [vmem:[%s379] sm:$0xf]
      %381 = vrot.lane.b32.xlu0 %v263, 126
      %v382 = vpop.permute.xlu0 %381
      %383 = vrot.lane.b32.xlu0 %v264, 126
      %v384 = vpop.permute.xlu0 %383
      %385 = vrot.lane.b32.xlu0 %v265, 126
      %v386 = vpop.permute.xlu0 %385
      %vm387 = vcmask 1031168
      %v388 = vsel %vm387, %v382, %v384
      %v389 = vsel %vm387, %v384, %v386
      %v391 = vsel %vm275, %v380, 0
      %v394 = vsel %vm279, %v388, 0
      %v397 = vsel %vm279, %v389, 0
      %v400 = vsel %vm279, %v386, 0
      %402 = vmatpush.bf16.msra.mxu0 0
      %403 = vmatpush.bf16.msra.mxu0 0
      %404 = vmatpush.bf16.msra.mxu0 0
      %405 = vmatpush.bf16.msra.mxu0 0
      %406 = vmatpush.bf16.msra.mxu0 0
      %407 = vmatpush.bf16.msra.mxu0 0
      %408 = vmatpush.bf16.msra.mxu0 0
      %409 = vmatpush.bf16.msra.mxu0 %v394
      %410 = vmatmul.bf16.gmra.mxu0 %v391
      %v411 = vpop.f32.mrf.mxu0
      %v412 = vadd.f32 0.0, %v411
      %v413 = vpop.f32.mrf.mxu0
      %414 = vdwg.mxu0
      %415 = vmatpush.bf16.msra.mxu0 0
      %416 = vmatpush.bf16.msra.mxu0 0
      %417 = vmatpush.bf16.msra.mxu0 0
      %418 = vmatpush.bf16.msra.mxu0 0
      %419 = vmatpush.bf16.msra.mxu0 0
      %420 = vmatpush.bf16.msra.mxu0 0
      %421 = vmatpush.bf16.msra.mxu0 0
      %422 = vmatpush.bf16.msra.mxu0 %v397
      %423 = vmatmul.bf16.gmra.mxu0 %v391
      %v424 = vpop.f32.mrf.mxu0
      %v425 = vadd.f32 0.0, %v424
      %v426 = vpop.f32.mrf.mxu0
      %427 = vdwg.mxu0
      %428 = vmatpush.bf16.msra.mxu0 0
      %429 = vmatpush.bf16.msra.mxu0 0
      %430 = vmatpush.bf16.msra.mxu0 0
      %431 = vmatpush.bf16.msra.mxu0 0
      %432 = vmatpush.bf16.msra.mxu0 0
      %433 = vmatpush.bf16.msra.mxu0 0
      %434 = vmatpush.bf16.msra.mxu0 0
      %435 = vmatpush.bf16.msra.mxu0 %v400
      %436 = vmatmul.bf16.gmra.mxu0 %v391
      %v437 = vpop.f32.mrf.mxu0
      %v438 = vadd.f32 0.0, %v437
      %v439 = vpop.f32.mrf.mxu0
      %440 = vdwg.mxu0
      %v441 = vadd.f32 %v350, %v412
      %v442 = vadd.f32 %v363, %v425
      %v443 = vadd.f32 %v376, %v438
      %s444 = scalar_lea.vmem %s1, 12
      %v445 = vld [vmem:[%s444] sm:$0xf]
      %446 = vrot.lane.b32.xlu0 %v263, 110
      %v447 = vpop.permute.xlu0 %446
      %448 = vrot.lane.b32.xlu0 %v264, 110
      %v449 = vpop.permute.xlu0 %448
      %450 = vrot.lane.b32.xlu0 %v265, 110
      %v451 = vpop.permute.xlu0 %450
      %vm452 = vcmask 900096
      %v453 = vsel %vm452, %v447, %v449
      %v454 = vsel %vm452, %v449, %v451
      %v456 = vsel %vm275, %v445, 0
      %v459 = vsel %vm279, %v453, 0
      %v462 = vsel %vm279, %v454, 0
      %v465 = vsel %vm279, %v451, 0
      %467 = vmatpush.bf16.msra.mxu0 0
      %468 = vmatpush.bf16.msra.mxu0 0
      %469 = vmatpush.bf16.msra.mxu0 0
      %470 = vmatpush.bf16.msra.mxu0 0
      %471 = vmatpush.bf16.msra.mxu0 0
      %472 = vmatpush.bf16.msra.mxu0 0
      %473 = vmatpush.bf16.msra.mxu0 0
      %474 = vmatpush.bf16.msra.mxu0 %v459
      %475 = vmatmul.bf16.gmra.mxu0 %v456
      %v476 = vpop.f32.mrf.mxu0
      %v477 = vadd.f32 0.0, %v476
      %v478 = vpop.f32.mrf.mxu0
      %479 = vdwg.mxu0
      %480 = vmatpush.bf16.msra.mxu0 0
      %481 = vmatpush.bf16.msra.mxu0 0
      %482 = vmatpush.bf16.msra.mxu0 0
      %483 = vmatpush.bf16.msra.mxu0 0
      %484 = vmatpush.bf16.msra.mxu0 0
      %485 = vmatpush.bf16.msra.mxu0 0
      %486 = vmatpush.bf16.msra.mxu0 0
      %487 = vmatpush.bf16.msra.mxu0 %v462
      %488 = vmatmul.bf16.gmra.mxu0 %v456
      %v489 = vpop.f32.mrf.mxu0
      %v490 = vadd.f32 0.0, %v489
      %v491 = vpop.f32.mrf.mxu0
      %492 = vdwg.mxu0
      %493 = vmatpush.bf16.msra.mxu0 0
      %494 = vmatpush.bf16.msra.mxu0 0
      %495 = vmatpush.bf16.msra.mxu0 0
      %496 = vmatpush.bf16.msra.mxu0 0
      %497 = vmatpush.bf16.msra.mxu0 0
      %498 = vmatpush.bf16.msra.mxu0 0
      %499 = vmatpush.bf16.msra.mxu0 0
      %500 = vmatpush.bf16.msra.mxu0 %v465
      %501 = vmatmul.bf16.gmra.mxu0 %v456
      %v502 = vpop.f32.mrf.mxu0
      %v503 = vadd.f32 0.0, %v502
      %v504 = vpop.f32.mrf.mxu0
      %505 = vdwg.mxu0
      %v506 = vadd.f32 %v441, %v477
      %v507 = vadd.f32 %v442, %v490
      %v508 = vadd.f32 %v443, %v503
      %s509 = scalar_lea.vmem %s1, 16
      %v510 = vld [vmem:[%s509] sm:$0xf]
      %511 = vrot.lane.b32.xlu0 %v263, 109
      %v512 = vpop.permute.xlu0 %511
      %513 = vrot.lane.b32.xlu0 %v264, 109
      %v514 = vpop.permute.xlu0 %513
      %515 = vrot.lane.b32.xlu0 %v265, 109
      %v516 = vpop.permute.xlu0 %515
      %vm517 = vcmask 891904
      %v518 = vsel %vm517, %v512, %v514
      %v519 = vsel %vm517, %v514, %v516
      %v521 = vsel %vm275, %v510, 0
      %v524 = vsel %vm279, %v518, 0
      %v527 = vsel %vm279, %v519, 0
      %v530 = vsel %vm279, %v516, 0
      %532 = vmatpush.bf16.msra.mxu0 0
      %533 = vmatpush.bf16.msra.mxu0 0
      %534 = vmatpush.bf16.msra.mxu0 0
      %535 = vmatpush.bf16.msra.mxu0 0
      %536 = vmatpush.bf16.msra.mxu0 0
      %537 = vmatpush.bf16.msra.mxu0 0
      %538 = vmatpush.bf16.msra.mxu0 0
      %539 = vmatpush.bf16.msra.mxu0 %v524
      %540 = vmatmul.bf16.gmra.mxu0 %v521
      %v541 = vpop.f32.mrf.mxu0
      %v542 = vadd.f32 0.0, %v541
      %v543 = vpop.f32.mrf.mxu0
      %544 = vdwg.mxu0
      %545 = vmatpush.bf16.msra.mxu0 0
      %546 = vmatpush.bf16.msra.mxu0 0
      %547 = vmatpush.bf16.msra.mxu0 0
      %548 = vmatpush.bf16.msra.mxu0 0
      %549 = vmatpush.bf16.msra.mxu0 0
      %550 = vmatpush.bf16.msra.mxu0 0
      %551 = vmatpush.bf16.msra.mxu0 0
      %552 = vmatpush.bf16.msra.mxu0 %v527
      %553 = vmatmul.bf16.gmra.mxu0 %v521
      %v554 = vpop.f32.mrf.mxu0
      %v555 = vadd.f32 0.0, %v554
      %v556 = vpop.f32.mrf.mxu0
      %557 = vdwg.mxu0
      %558 = vmatpush.bf16.msra.mxu0 0
      %559 = vmatpush.bf16.msra.mxu0 0
      %560 = vmatpush.bf16.msra.mxu0 0
      %561 = vmatpush.bf16.msra.mxu0 0
      %562 = vmatpush.bf16.msra.mxu0 0
      %563 = vmatpush.bf16.msra.mxu0 0
      %564 = vmatpush.bf16.msra.mxu0 0
      %565 = vmatpush.bf16.msra.mxu0 %v530
      %566 = vmatmul.bf16.gmra.mxu0 %v521
      %v567 = vpop.f32.mrf.mxu0
      %v568 = vadd.f32 0.0, %v567
      %v569 = vpop.f32.mrf.mxu0
      %570 = vdwg.mxu0
      %v571 = vadd.f32 %v506, %v542
      %v572 = vadd.f32 %v507, %v555
      %v573 = vadd.f32 %v508, %v568
      %s574 = scalar_lea.vmem %s1, 20
      %v575 = vld [vmem:[%s574] sm:$0xf]
      %576 = vrot.lane.b32.xlu0 %v263, 108
      %v577 = vpop.permute.xlu0 %576
      %578 = vrot.lane.b32.xlu0 %v264, 108
      %v579 = vpop.permute.xlu0 %578
      %580 = vrot.lane.b32.xlu0 %v265, 108
      %v581 = vpop.permute.xlu0 %580
      %vm582 = vcmask 883712
      %v583 = vsel %vm582, %v577, %v579
      %v584 = vsel %vm582, %v579, %v581
      %v586 = vsel %vm275, %v575, 0
      %v589 = vsel %vm279, %v583, 0
      %v592 = vsel %vm279, %v584, 0
      %v595 = vsel %vm279, %v581, 0
      %597 = vmatpush.bf16.msra.mxu0 0
      %598 = vmatpush.bf16.msra.mxu0 0
      %599 = vmatpush.bf16.msra.mxu0 0
      %600 = vmatpush.bf16.msra.mxu0 0
      %601 = vmatpush.bf16.msra.mxu0 0
      %602 = vmatpush.bf16.msra.mxu0 0
      %603 = vmatpush.bf16.msra.mxu0 0
      %604 = vmatpush.bf16.msra.mxu0 %v589
      %605 = vmatmul.bf16.gmra.mxu0 %v586
      %v606 = vpop.f32.mrf.mxu0
      %v607 = vadd.f32 0.0, %v606
      %v608 = vpop.f32.mrf.mxu0
      %609 = vdwg.mxu0
      %610 = vmatpush.bf16.msra.mxu0 0
      %611 = vmatpush.bf16.msra.mxu0 0
      %612 = vmatpush.bf16.msra.mxu0 0
      %613 = vmatpush.bf16.msra.mxu0 0
      %614 = vmatpush.bf16.msra.mxu0 0
      %615 = vmatpush.bf16.msra.mxu0 0
      %616 = vmatpush.bf16.msra.mxu0 0
      %617 = vmatpush.bf16.msra.mxu0 %v592
      %618 = vmatmul.bf16.gmra.mxu0 %v586
      %v619 = vpop.f32.mrf.mxu0
      %v620 = vadd.f32 0.0, %v619
      %v621 = vpop.f32.mrf.mxu0
      %622 = vdwg.mxu0
      %623 = vmatpush.bf16.msra.mxu0 0
      %624 = vmatpush.bf16.msra.mxu0 0
      %625 = vmatpush.bf16.msra.mxu0 0
      %626 = vmatpush.bf16.msra.mxu0 0
      %627 = vmatpush.bf16.msra.mxu0 0
      %628 = vmatpush.bf16.msra.mxu0 0
      %629 = vmatpush.bf16.msra.mxu0 0
      %630 = vmatpush.bf16.msra.mxu0 %v595
      %631 = vmatmul.bf16.gmra.mxu0 %v586
      %v632 = vpop.f32.mrf.mxu0
      %v633 = vadd.f32 0.0, %v632
      %v634 = vpop.f32.mrf.mxu0
      %635 = vdwg.mxu0
      %v636 = vadd.f32 %v571, %v607
      %v637 = vadd.f32 %v572, %v620
      %v638 = vadd.f32 %v573, %v633
      %s639 = scalar_lea.vmem %s1, 24
      %v640 = vld [vmem:[%s639] sm:$0xf]
      %641 = vrot.lane.b32.xlu0 %v263, 92
      %v642 = vpop.permute.xlu0 %641
      %643 = vrot.lane.b32.xlu0 %v264, 92
      %v644 = vpop.permute.xlu0 %643
      %645 = vrot.lane.b32.xlu0 %v265, 92
      %v646 = vpop.permute.xlu0 %645
      %vm647 = vcmask 752640
      %v648 = vsel %vm647, %v642, %v644
      %v649 = vsel %vm647, %v644, %v646
      %v651 = vsel %vm275, %v640, 0
      %v654 = vsel %vm279, %v648, 0
      %v657 = vsel %vm279, %v649, 0
      %v660 = vsel %vm279, %v646, 0
      %662 = vmatpush.bf16.msra.mxu0 0
      %663 = vmatpush.bf16.msra.mxu0 0
      %664 = vmatpush.bf16.msra.mxu0 0
      %665 = vmatpush.bf16.msra.mxu0 0
      %666 = vmatpush.bf16.msra.mxu0 0
      %667 = vmatpush.bf16.msra.mxu0 0
      %668 = vmatpush.bf16.msra.mxu0 0
      %669 = vmatpush.bf16.msra.mxu0 %v654
      %670 = vmatmul.bf16.gmra.mxu0 %v651
      %v671 = vpop.f32.mrf.mxu0
      %v672 = vadd.f32 0.0, %v671
      %v673 = vpop.f32.mrf.mxu0
      %674 = vdwg.mxu0
      %675 = vmatpush.bf16.msra.mxu0 0
      %676 = vmatpush.bf16.msra.mxu0 0
      %677 = vmatpush.bf16.msra.mxu0 0
      %678 = vmatpush.bf16.msra.mxu0 0
      %679 = vmatpush.bf16.msra.mxu0 0
      %680 = vmatpush.bf16.msra.mxu0 0
      %681 = vmatpush.bf16.msra.mxu0 0
      %682 = vmatpush.bf16.msra.mxu0 %v657
      %683 = vmatmul.bf16.gmra.mxu0 %v651
      %v684 = vpop.f32.mrf.mxu0
      %v685 = vadd.f32 0.0, %v684
      %v686 = vpop.f32.mrf.mxu0
      %687 = vdwg.mxu0
      %688 = vmatpush.bf16.msra.mxu0 0
      %689 = vmatpush.bf16.msra.mxu0 0
      %690 = vmatpush.bf16.msra.mxu0 0
      %691 = vmatpush.bf16.msra.mxu0 0
      %692 = vmatpush.bf16.msra.mxu0 0
      %693 = vmatpush.bf16.msra.mxu0 0
      %694 = vmatpush.bf16.msra.mxu0 0
      %695 = vmatpush.bf16.msra.mxu0 %v660
      %696 = vmatmul.bf16.gmra.mxu0 %v651
      %v697 = vpop.f32.mrf.mxu0
      %v698 = vadd.f32 0.0, %v697
      %v699 = vpop.f32.mrf.mxu0
      %700 = vdwg.mxu0
      %v701 = vadd.f32 %v636, %v672
      %v702 = vadd.f32 %v637, %v685
      %v703 = vadd.f32 %v638, %v698
      %s704 = scalar_lea.vmem %s1, 28
      %v705 = vld [vmem:[%s704] sm:$0xf]
      %706 = vrot.lane.b32.xlu0 %v263, 91
      %v707 = vpop.permute.xlu0 %706
      %708 = vrot.lane.b32.xlu0 %v264, 91
      %v709 = vpop.permute.xlu0 %708
      %710 = vrot.lane.b32.xlu0 %v265, 91
      %v711 = vpop.permute.xlu0 %710
      %vm712 = vcmask 744448
      %v713 = vsel %vm712, %v707, %v709
      %v714 = vsel %vm712, %v709, %v711
      %v716 = vsel %vm275, %v705, 0
      %v719 = vsel %vm279, %v713, 0
      %v722 = vsel %vm279, %v714, 0
      %v725 = vsel %vm279, %v711, 0
      %727 = vmatpush.bf16.msra.mxu0 0
      %728 = vmatpush.bf16.msra.mxu0 0
      %729 = vmatpush.bf16.msra.mxu0 0
      %730 = vmatpush.bf16.msra.mxu0 0
      %731 = vmatpush.bf16.msra.mxu0 0
      %732 = vmatpush.bf16.msra.mxu0 0
      %733 = vmatpush.bf16.msra.mxu0 0
      %734 = vmatpush.bf16.msra.mxu0 %v719
      %735 = vmatmul.bf16.gmra.mxu0 %v716
      %v736 = vpop.f32.mrf.mxu0
      %v737 = vadd.f32 0.0, %v736
      %v738 = vpop.f32.mrf.mxu0
      %739 = vdwg.mxu0
      %740 = vmatpush.bf16.msra.mxu0 0
      %741 = vmatpush.bf16.msra.mxu0 0
      %742 = vmatpush.bf16.msra.mxu0 0
      %743 = vmatpush.bf16.msra.mxu0 0
      %744 = vmatpush.bf16.msra.mxu0 0
      %745 = vmatpush.bf16.msra.mxu0 0
      %746 = vmatpush.bf16.msra.mxu0 0
      %747 = vmatpush.bf16.msra.mxu0 %v722
      %748 = vmatmul.bf16.gmra.mxu0 %v716
      %v749 = vpop.f32.mrf.mxu0
      %v750 = vadd.f32 0.0, %v749
      %v751 = vpop.f32.mrf.mxu0
      %752 = vdwg.mxu0
      %753 = vmatpush.bf16.msra.mxu0 0
      %754 = vmatpush.bf16.msra.mxu0 0
      %755 = vmatpush.bf16.msra.mxu0 0
      %756 = vmatpush.bf16.msra.mxu0 0
      %757 = vmatpush.bf16.msra.mxu0 0
      %758 = vmatpush.bf16.msra.mxu0 0
      %759 = vmatpush.bf16.msra.mxu0 0
      %760 = vmatpush.bf16.msra.mxu0 %v725
      %761 = vmatmul.bf16.gmra.mxu0 %v716
      %v762 = vpop.f32.mrf.mxu0
      %v763 = vadd.f32 0.0, %v762
      %v764 = vpop.f32.mrf.mxu0
      %765 = vdwg.mxu0
      %v766 = vadd.f32 %v701, %v737
      %v767 = vadd.f32 %v702, %v750
      %v768 = vadd.f32 %v703, %v763
      %s769 = scalar_lea.vmem %s1, 32
      %v770 = vld [vmem:[%s769] sm:$0xf]
      %771 = vrot.lane.b32.xlu0 %v263, 90
      %v772 = vpop.permute.xlu0 %771
      %773 = vrot.lane.b32.xlu0 %v264, 90
      %v774 = vpop.permute.xlu0 %773
      %775 = vrot.lane.b32.xlu0 %v265, 90
      %v776 = vpop.permute.xlu0 %775
      %vm777 = vcmask 736256
      %v778 = vsel %vm777, %v772, %v774
      %v779 = vsel %vm777, %v774, %v776
      %v781 = vsel %vm275, %v770, 0
      %v784 = vsel %vm279, %v778, 0
      %v787 = vsel %vm279, %v779, 0
      %v790 = vsel %vm279, %v776, 0
      %792 = vmatpush.bf16.msra.mxu0 0
      %793 = vmatpush.bf16.msra.mxu0 0
      %794 = vmatpush.bf16.msra.mxu0 0
      %795 = vmatpush.bf16.msra.mxu0 0
      %796 = vmatpush.bf16.msra.mxu0 0
      %797 = vmatpush.bf16.msra.mxu0 0
      %798 = vmatpush.bf16.msra.mxu0 0
      %799 = vmatpush.bf16.msra.mxu0 %v784
      %800 = vmatmul.bf16.gmra.mxu0 %v781
      %v801 = vpop.f32.mrf.mxu0
      %v802 = vadd.f32 0.0, %v801
      %v803 = vpop.f32.mrf.mxu0
      %804 = vdwg.mxu0
      %805 = vmatpush.bf16.msra.mxu0 0
      %806 = vmatpush.bf16.msra.mxu0 0
      %807 = vmatpush.bf16.msra.mxu0 0
      %808 = vmatpush.bf16.msra.mxu0 0
      %809 = vmatpush.bf16.msra.mxu0 0
      %810 = vmatpush.bf16.msra.mxu0 0
      %811 = vmatpush.bf16.msra.mxu0 0
      %812 = vmatpush.bf16.msra.mxu0 %v787
      %813 = vmatmul.bf16.gmra.mxu0 %v781
      %v814 = vpop.f32.mrf.mxu0
      %v815 = vadd.f32 0.0, %v814
      %v816 = vpop.f32.mrf.mxu0
      %817 = vdwg.mxu0
      %818 = vmatpush.bf16.msra.mxu0 0
      %819 = vmatpush.bf16.msra.mxu0 0
      %820 = vmatpush.bf16.msra.mxu0 0
      %821 = vmatpush.bf16.msra.mxu0 0
      %822 = vmatpush.bf16.msra.mxu0 0
      %823 = vmatpush.bf16.msra.mxu0 0
      %824 = vmatpush.bf16.msra.mxu0 0
      %825 = vmatpush.bf16.msra.mxu0 %v790
      %826 = vmatmul.bf16.gmra.mxu0 %v781
      %v827 = vpop.f32.mrf.mxu0
      %v828 = vadd.f32 0.0, %v827
      %v829 = vpop.f32.mrf.mxu0
      %830 = vdwg.mxu0
      %v831 = vadd.f32 %v766, %v802
      %v832 = vadd.f32 %v767, %v815
      %v833 = vadd.f32 %v768, %v828
      %v834 = vld [vmem:[%s3] sm:$0xff]
      %836 = vset.pattern.permute.xlu0 0
      %837 = vperm.xlu0 %836, %v834
      %v838 = vpop.permute.xlu0 %837
      %v840 = vadd.f32 %v831, %v838
      %v841 = vadd.f32 %v832, %v838
      %v842 = vadd.f32 %v833, %v838
      %v843 = vmax.f32 %v840, 0.0
      %v844 = vmax.f32 %v841, 0.0
      %v845 = vmax.f32 %v842, 0.0
      %v846 = vld [vmem:[%s5] sm:$0x7]
      %v848 = vperm.slane %v846, 0
      %v849 = vperm.slane %v846, 1
      %v850 = vperm.slane %v846, 2
      %v854 = vmul.f32 %v843, %v848
      %v855 = vmul.f32 %v844, %v849
      %v856 = vmul.f32 %v845, %v850
      %857 = vst [vmem:[#allocation2] sm:$0xff] 0.0
      %858 = vst [vmem:[#allocation2 + $0x8] sm:$0xff] 0.0
      %vm859 = vcmask 703488
      %860 = vst.msk [vmem:[#allocation2 + $0x10] sm:$0xff] %vm859, 0.0
      %864 = vrot.lane.b32.xlu0 %v854, 19
      %v865 = vpop.permute.xlu0 %864
      %866 = vrot.lane.b32.xlu0 %v855, 19
      %v867 = vpop.permute.xlu0 %866
      %868 = vrot.lane.b32.xlu0 %v856, 19
      %v869 = vpop.permute.xlu0 %868
      %vm870 = vcmask 154624
      %v871 = vsel %vm870, %v865, %v867
      %v872 = vsel %vm870, %v867, %v869
      %vm876 = vcmask 1047704
      %877 = vst.msk [vmem:[#allocation2] sm:$0xff] %vm876, %v865
      %878 = vst [vmem:[#allocation2 + $0x8] sm:$0xff] %v871
      %vm879 = vcmask 416768
      %880 = vst.msk [vmem:[#allocation2 + $0x10] sm:$0xff] %vm879, %v872
      %v881 = vld [vmem:[%s2] sm:$0xff]
      %v882 = vld [vmem:[#allocation2] sm:$0xff]
      %v883 = vld [vmem:[#allocation2 + $0x8] sm:$0xff]
      %v884 = vld [vmem:[#allocation2 + $0x10] sm:$0xff]
      %s885 = scalar_lea.vmem %s2, 8
      %v886 = vld [vmem:[%s885] sm:$0xff]
      %890 = vrot.lane.b32.xlu0 %v882, 127
      %v891 = vpop.permute.xlu0 %890
      %892 = vrot.lane.b32.xlu0 %v883, 127
      %v893 = vpop.permute.xlu0 %892
      %894 = vrot.lane.b32.xlu0 %v884, 127
      %v895 = vpop.permute.xlu0 %894
      %vm896 = vcmask 1039360
      %v897 = vsel %vm896, %v891, %v893
      %v898 = vsel %vm896, %v893, %v895
      %v903 = vsel %vm275, %v886, 0
      %905 = vmatpush.msra.mxu0 0.0
      %906 = vmatpush.msra.mxu0 0.0
      %907 = vmatpush.msra.mxu0 0.0
      %908 = vmatpush.msra.mxu0 0.0
      %909 = vmatpush.msra.mxu0 0.0
      %910 = vmatpush.msra.mxu0 0.0
      %911 = vmatpush.msra.mxu0 0.0
      %912 = vmatpush.msra.mxu0 0.0
      %913 = vmatpush.msra.mxu0 0.0
      %914 = vmatpush.msra.mxu0 0.0
      %915 = vmatpush.msra.mxu0 0.0
      %916 = vmatpush.msra.mxu0 0.0
      %917 = vmatpush.msra.mxu0 0.0
      %918 = vmatpush.msra.mxu0 0.0
      %919 = vmatpush.msra.mxu0 0.0
      %920 = vmatpush.msra.mxu0 %v897
      %921 = vmatmul.f32.gmra.mxu0 %v903
      %v922 = vpop.f32.mrf.mxu0
      %v923 = vadd.f32 0.0, %v922
      %924 = vdwg.mxu0
      %925 = vmatpush.msra.mxu0 0.0
      %926 = vmatpush.msra.mxu0 0.0
      %927 = vmatpush.msra.mxu0 0.0
      %928 = vmatpush.msra.mxu0 0.0
      %929 = vmatpush.msra.mxu0 0.0
      %930 = vmatpush.msra.mxu0 0.0
      %931 = vmatpush.msra.mxu0 0.0
      %932 = vmatpush.msra.mxu0 0.0
      %933 = vmatpush.msra.mxu0 0.0
      %934 = vmatpush.msra.mxu0 0.0
      %935 = vmatpush.msra.mxu0 0.0
      %936 = vmatpush.msra.mxu0 0.0
      %937 = vmatpush.msra.mxu0 0.0
      %938 = vmatpush.msra.mxu0 0.0
      %939 = vmatpush.msra.mxu0 0.0
      %940 = vmatpush.msra.mxu0 %v898
      %941 = vmatmul.f32.gmra.mxu0 %v903
      %v942 = vpop.f32.mrf.mxu0
      %v943 = vadd.f32 0.0, %v942
      %944 = vdwg.mxu0
      %945 = vmatpush.msra.mxu0 0.0
      %946 = vmatpush.msra.mxu0 0.0
      %947 = vmatpush.msra.mxu0 0.0
      %948 = vmatpush.msra.mxu0 0.0
      %949 = vmatpush.msra.mxu0 0.0
      %950 = vmatpush.msra.mxu0 0.0
      %951 = vmatpush.msra.mxu0 0.0
      %952 = vmatpush.msra.mxu0 0.0
      %953 = vmatpush.msra.mxu0 0.0
      %954 = vmatpush.msra.mxu0 0.0
      %955 = vmatpush.msra.mxu0 0.0
      %956 = vmatpush.msra.mxu0 0.0
      %957 = vmatpush.msra.mxu0 0.0
      %958 = vmatpush.msra.mxu0 0.0
      %959 = vmatpush.msra.mxu0 0.0
      %960 = vmatpush.msra.mxu0 %v895
      %961 = vmatmul.f32.gmra.mxu0 %v903
      %v962 = vpop.f32.mrf.mxu0
      %v963 = vadd.f32 0.0, %v962
      %964 = vdwg.mxu0
      %v966 = vsel %vm275, %v881, 0
      %968 = vmatpush.msra.mxu0 0.0
      %969 = vmatpush.msra.mxu0 0.0
      %970 = vmatpush.msra.mxu0 0.0
      %971 = vmatpush.msra.mxu0 0.0
      %972 = vmatpush.msra.mxu0 0.0
      %973 = vmatpush.msra.mxu0 0.0
      %974 = vmatpush.msra.mxu0 0.0
      %975 = vmatpush.msra.mxu0 0.0
      %976 = vmatpush.msra.mxu0 0.0
      %977 = vmatpush.msra.mxu0 0.0
      %978 = vmatpush.msra.mxu0 0.0
      %979 = vmatpush.msra.mxu0 0.0
      %980 = vmatpush.msra.mxu0 0.0
      %981 = vmatpush.msra.mxu0 0.0
      %982 = vmatpush.msra.mxu0 0.0
      %983 = vmatpush.msra.mxu0 %v882
      %984 = vmatmul.f32.gmra.mxu0 %v966
      %v985 = vpop.f32.mrf.mxu0
      %v986 = vadd.f32 %v923, %v985
      %987 = vdwg.mxu0
      %988 = vmatpush.msra.mxu0 0.0
      %989 = vmatpush.msra.mxu0 0.0
      %990 = vmatpush.msra.mxu0 0.0
      %991 = vmatpush.msra.mxu0 0.0
      %992 = vmatpush.msra.mxu0 0.0
      %993 = vmatpush.msra.mxu0 0.0
      %994 = vmatpush.msra.mxu0 0.0
      %995 = vmatpush.msra.mxu0 0.0
      %996 = vmatpush.msra.mxu0 0.0
      %997 = vmatpush.msra.mxu0 0.0
      %998 = vmatpush.msra.mxu0 0.0
      %999 = vmatpush.msra.mxu0 0.0
      %1000 = vmatpush.msra.mxu0 0.0
      %1001 = vmatpush.msra.mxu0 0.0
      %1002 = vmatpush.msra.mxu0 0.0
      %1003 = vmatpush.msra.mxu0 %v883
      %1004 = vmatmul.f32.gmra.mxu0 %v966
      %v1005 = vpop.f32.mrf.mxu0
      %v1006 = vadd.f32 %v943, %v1005
      %1007 = vdwg.mxu0
      %1008 = vmatpush.msra.mxu0 0.0
      %1009 = vmatpush.msra.mxu0 0.0
      %1010 = vmatpush.msra.mxu0 0.0
      %1011 = vmatpush.msra.mxu0 0.0
      %1012 = vmatpush.msra.mxu0 0.0
      %1013 = vmatpush.msra.mxu0 0.0
      %1014 = vmatpush.msra.mxu0 0.0
      %1015 = vmatpush.msra.mxu0 0.0
      %1016 = vmatpush.msra.mxu0 0.0
      %1017 = vmatpush.msra.mxu0 0.0
      %1018 = vmatpush.msra.mxu0 0.0
      %1019 = vmatpush.msra.mxu0 0.0
      %1020 = vmatpush.msra.mxu0 0.0
      %1021 = vmatpush.msra.mxu0 0.0
      %1022 = vmatpush.msra.mxu0 0.0
      %1023 = vmatpush.msra.mxu0 %v884
      %1024 = vmatmul.f32.gmra.mxu0 %v966
      %v1025 = vpop.f32.mrf.mxu0
      %v1026 = vadd.f32 %v963, %v1025
      %1027 = vdwg.mxu0
      %s1028 = scalar_lea.vmem %s2, 16
      %v1029 = vld [vmem:[%s1028] sm:$0xff]
      %1030 = vrot.lane.b32.xlu0 %v882, 126
      %v1031 = vpop.permute.xlu0 %1030
      %1032 = vrot.lane.b32.xlu0 %v883, 126
      %v1033 = vpop.permute.xlu0 %1032
      %1034 = vrot.lane.b32.xlu0 %v884, 126
      %v1035 = vpop.permute.xlu0 %1034
      %vm1036 = vcmask 1031168
      %v1037 = vsel %vm1036, %v1031, %v1033
      %v1038 = vsel %vm1036, %v1033, %v1035
      %v1043 = vsel %vm275, %v1029, 0
      %1045 = vmatpush.msra.mxu0 0.0
      %1046 = vmatpush.msra.mxu0 0.0
      %1047 = vmatpush.msra.mxu0 0.0
      %1048 = vmatpush.msra.mxu0 0.0
      %1049 = vmatpush.msra.mxu0 0.0
      %1050 = vmatpush.msra.mxu0 0.0
      %1051 = vmatpush.msra.mxu0 0.0
      %1052 = vmatpush.msra.mxu0 0.0
      %1053 = vmatpush.msra.mxu0 0.0
      %1054 = vmatpush.msra.mxu0 0.0
      %1055 = vmatpush.msra.mxu0 0.0
      %1056 = vmatpush.msra.mxu0 0.0
      %1057 = vmatpush.msra.mxu0 0.0
      %1058 = vmatpush.msra.mxu0 0.0
      %1059 = vmatpush.msra.mxu0 0.0
      %1060 = vmatpush.msra.mxu0 %v1037
      %1061 = vmatmul.f32.gmra.mxu0 %v1043
      %v1062 = vpop.f32.mrf.mxu0
      %v1063 = vadd.f32 0.0, %v1062
      %1064 = vdwg.mxu0
      %1065 = vmatpush.msra.mxu0 0.0
      %1066 = vmatpush.msra.mxu0 0.0
      %1067 = vmatpush.msra.mxu0 0.0
      %1068 = vmatpush.msra.mxu0 0.0
      %1069 = vmatpush.msra.mxu0 0.0
      %1070 = vmatpush.msra.mxu0 0.0
      %1071 = vmatpush.msra.mxu0 0.0
      %1072 = vmatpush.msra.mxu0 0.0
      %1073 = vmatpush.msra.mxu0 0.0
      %1074 = vmatpush.msra.mxu0 0.0
      %1075 = vmatpush.msra.mxu0 0.0
      %1076 = vmatpush.msra.mxu0 0.0
      %1077 = vmatpush.msra.mxu0 0.0
      %1078 = vmatpush.msra.mxu0 0.0
      %1079 = vmatpush.msra.mxu0 0.0
      %1080 = vmatpush.msra.mxu0 %v1038
      %1081 = vmatmul.f32.gmra.mxu0 %v1043
      %v1082 = vpop.f32.mrf.mxu0
      %v1083 = vadd.f32 0.0, %v1082
      %1084 = vdwg.mxu0
      %1085 = vmatpush.msra.mxu0 0.0
      %1086 = vmatpush.msra.mxu0 0.0
      %1087 = vmatpush.msra.mxu0 0.0
      %1088 = vmatpush.msra.mxu0 0.0
      %1089 = vmatpush.msra.mxu0 0.0
      %1090 = vmatpush.msra.mxu0 0.0
      %1091 = vmatpush.msra.mxu0 0.0
      %1092 = vmatpush.msra.mxu0 0.0
      %1093 = vmatpush.msra.mxu0 0.0
      %1094 = vmatpush.msra.mxu0 0.0
      %1095 = vmatpush.msra.mxu0 0.0
      %1096 = vmatpush.msra.mxu0 0.0
      %1097 = vmatpush.msra.mxu0 0.0
      %1098 = vmatpush.msra.mxu0 0.0
      %1099 = vmatpush.msra.mxu0 0.0
      %1100 = vmatpush.msra.mxu0 %v1035
      %1101 = vmatmul.f32.gmra.mxu0 %v1043
      %v1102 = vpop.f32.mrf.mxu0
      %v1103 = vadd.f32 0.0, %v1102
      %1104 = vdwg.mxu0
      %v1105 = vadd.f32 %v986, %v1063
      %v1106 = vadd.f32 %v1006, %v1083
      %v1107 = vadd.f32 %v1026, %v1103
      %s1108 = scalar_lea.vmem %s2, 24
      %v1109 = vld [vmem:[%s1108] sm:$0xff]
      %1110 = vrot.lane.b32.xlu0 %v882, 110
      %v1111 = vpop.permute.xlu0 %1110
      %1112 = vrot.lane.b32.xlu0 %v883, 110
      %v1113 = vpop.permute.xlu0 %1112
      %1114 = vrot.lane.b32.xlu0 %v884, 110
      %v1115 = vpop.permute.xlu0 %1114
      %vm1116 = vcmask 900096
      %v1117 = vsel %vm1116, %v1111, %v1113
      %v1118 = vsel %vm1116, %v1113, %v1115
      %v1123 = vsel %vm275, %v1109, 0
      %1125 = vmatpush.msra.mxu0 0.0
      %1126 = vmatpush.msra.mxu0 0.0
      %1127 = vmatpush.msra.mxu0 0.0
      %1128 = vmatpush.msra.mxu0 0.0
      %1129 = vmatpush.msra.mxu0 0.0
      %1130 = vmatpush.msra.mxu0 0.0
      %1131 = vmatpush.msra.mxu0 0.0
      %1132 = vmatpush.msra.mxu0 0.0
      %1133 = vmatpush.msra.mxu0 0.0
      %1134 = vmatpush.msra.mxu0 0.0
      %1135 = vmatpush.msra.mxu0 0.0
      %1136 = vmatpush.msra.mxu0 0.0
      %1137 = vmatpush.msra.mxu0 0.0
      %1138 = vmatpush.msra.mxu0 0.0
      %1139 = vmatpush.msra.mxu0 0.0
      %1140 = vmatpush.msra.mxu0 %v1117
      %1141 = vmatmul.f32.gmra.mxu0 %v1123
      %v1142 = vpop.f32.mrf.mxu0
      %v1143 = vadd.f32 0.0, %v1142
      %1144 = vdwg.mxu0
      %1145 = vmatpush.msra.mxu0 0.0
      %1146 = vmatpush.msra.mxu0 0.0
      %1147 = vmatpush.msra.mxu0 0.0
      %1148 = vmatpush.msra.mxu0 0.0
      %1149 = vmatpush.msra.mxu0 0.0
      %1150 = vmatpush.msra.mxu0 0.0
      %1151 = vmatpush.msra.mxu0 0.0
      %1152 = vmatpush.msra.mxu0 0.0
      %1153 = vmatpush.msra.mxu0 0.0
      %1154 = vmatpush.msra.mxu0 0.0
      %1155 = vmatpush.msra.mxu0 0.0
      %1156 = vmatpush.msra.mxu0 0.0
      %1157 = vmatpush.msra.mxu0 0.0
      %1158 = vmatpush.msra.mxu0 0.0
      %1159 = vmatpush.msra.mxu0 0.0
      %1160 = vmatpush.msra.mxu0 %v1118
      %1161 = vmatmul.f32.gmra.mxu0 %v1123
      %v1162 = vpop.f32.mrf.mxu0
      %v1163 = vadd.f32 0.0, %v1162
      %1164 = vdwg.mxu0
      %1165 = vmatpush.msra.mxu0 0.0
      %1166 = vmatpush.msra.mxu0 0.0
      %1167 = vmatpush.msra.mxu0 0.0
      %1168 = vmatpush.msra.mxu0 0.0
      %1169 = vmatpush.msra.mxu0 0.0
      %1170 = vmatpush.msra.mxu0 0.0
      %1171 = vmatpush.msra.mxu0 0.0
      %1172 = vmatpush.msra.mxu0 0.0
      %1173 = vmatpush.msra.mxu0 0.0
      %1174 = vmatpush.msra.mxu0 0.0
      %1175 = vmatpush.msra.mxu0 0.0
      %1176 = vmatpush.msra.mxu0 0.0
      %1177 = vmatpush.msra.mxu0 0.0
      %1178 = vmatpush.msra.mxu0 0.0
      %1179 = vmatpush.msra.mxu0 0.0
      %1180 = vmatpush.msra.mxu0 %v1115
      %1181 = vmatmul.f32.gmra.mxu0 %v1123
      %v1182 = vpop.f32.mrf.mxu0
      %v1183 = vadd.f32 0.0, %v1182
      %1184 = vdwg.mxu0
      %v1185 = vadd.f32 %v1105, %v1143
      %v1186 = vadd.f32 %v1106, %v1163
      %v1187 = vadd.f32 %v1107, %v1183
      %s1188 = scalar_lea.vmem %s2, 32
      %v1189 = vld [vmem:[%s1188] sm:$0xff]
      %1190 = vrot.lane.b32.xlu0 %v882, 109
      %v1191 = vpop.permute.xlu0 %1190
      %1192 = vrot.lane.b32.xlu0 %v883, 109
      %v1193 = vpop.permute.xlu0 %1192
      %1194 = vrot.lane.b32.xlu0 %v884, 109
      %v1195 = vpop.permute.xlu0 %1194
      %vm1196 = vcmask 891904
      %v1197 = vsel %vm1196, %v1191, %v1193
      %v1198 = vsel %vm1196, %v1193, %v1195
      %v1203 = vsel %vm275, %v1189, 0
      %1205 = vmatpush.msra.mxu0 0.0
      %1206 = vmatpush.msra.mxu0 0.0
      %1207 = vmatpush.msra.mxu0 0.0
      %1208 = vmatpush.msra.mxu0 0.0
      %1209 = vmatpush.msra.mxu0 0.0
      %1210 = vmatpush.msra.mxu0 0.0
      %1211 = vmatpush.msra.mxu0 0.0
      %1212 = vmatpush.msra.mxu0 0.0
      %1213 = vmatpush.msra.mxu0 0.0
      %1214 = vmatpush.msra.mxu0 0.0
      %1215 = vmatpush.msra.mxu0 0.0
      %1216 = vmatpush.msra.mxu0 0.0
      %1217 = vmatpush.msra.mxu0 0.0
      %1218 = vmatpush.msra.mxu0 0.0
      %1219 = vmatpush.msra.mxu0 0.0
      %1220 = vmatpush.msra.mxu0 %v1197
      %1221 = vmatmul.f32.gmra.mxu0 %v1203
      %v1222 = vpop.f32.mrf.mxu0
      %v1223 = vadd.f32 0.0, %v1222
      %1224 = vdwg.mxu0
      %1225 = vmatpush.msra.mxu0 0.0
      %1226 = vmatpush.msra.mxu0 0.0
      %1227 = vmatpush.msra.mxu0 0.0
      %1228 = vmatpush.msra.mxu0 0.0
      %1229 = vmatpush.msra.mxu0 0.0
      %1230 = vmatpush.msra.mxu0 0.0
      %1231 = vmatpush.msra.mxu0 0.0
      %1232 = vmatpush.msra.mxu0 0.0
      %1233 = vmatpush.msra.mxu0 0.0
      %1234 = vmatpush.msra.mxu0 0.0
      %1235 = vmatpush.msra.mxu0 0.0
      %1236 = vmatpush.msra.mxu0 0.0
      %1237 = vmatpush.msra.mxu0 0.0
      %1238 = vmatpush.msra.mxu0 0.0
      %1239 = vmatpush.msra.mxu0 0.0
      %1240 = vmatpush.msra.mxu0 %v1198
      %1241 = vmatmul.f32.gmra.mxu0 %v1203
      %v1242 = vpop.f32.mrf.mxu0
      %v1243 = vadd.f32 0.0, %v1242
      %1244 = vdwg.mxu0
      %1245 = vmatpush.msra.mxu0 0.0
      %1246 = vmatpush.msra.mxu0 0.0
      %1247 = vmatpush.msra.mxu0 0.0
      %1248 = vmatpush.msra.mxu0 0.0
      %1249 = vmatpush.msra.mxu0 0.0
      %1250 = vmatpush.msra.mxu0 0.0
      %1251 = vmatpush.msra.mxu0 0.0
      %1252 = vmatpush.msra.mxu0 0.0
      %1253 = vmatpush.msra.mxu0 0.0
      %1254 = vmatpush.msra.mxu0 0.0
      %1255 = vmatpush.msra.mxu0 0.0
      %1256 = vmatpush.msra.mxu0 0.0
      %1257 = vmatpush.msra.mxu0 0.0
      %1258 = vmatpush.msra.mxu0 0.0
      %1259 = vmatpush.msra.mxu0 0.0
      %1260 = vmatpush.msra.mxu0 %v1195
      %1261 = vmatmul.f32.gmra.mxu0 %v1203
      %v1262 = vpop.f32.mrf.mxu0
      %v1263 = vadd.f32 0.0, %v1262
      %1264 = vdwg.mxu0
      %v1265 = vadd.f32 %v1185, %v1223
      %v1266 = vadd.f32 %v1186, %v1243
      %v1267 = vadd.f32 %v1187, %v1263
      %s1268 = scalar_lea.vmem %s2, 40
      %v1269 = vld [vmem:[%s1268] sm:$0xff]
      %1270 = vrot.lane.b32.xlu0 %v882, 108
      %v1271 = vpop.permute.xlu0 %1270
      %1272 = vrot.lane.b32.xlu0 %v883, 108
      %v1273 = vpop.permute.xlu0 %1272
      %1274 = vrot.lane.b32.xlu0 %v884, 108
      %v1275 = vpop.permute.xlu0 %1274
      %vm1276 = vcmask 883712
      %v1277 = vsel %vm1276, %v1271, %v1273
      %v1278 = vsel %vm1276, %v1273, %v1275
      %v1283 = vsel %vm275, %v1269, 0
      %1285 = vmatpush.msra.mxu0 0.0
      %1286 = vmatpush.msra.mxu0 0.0
      %1287 = vmatpush.msra.mxu0 0.0
      %1288 = vmatpush.msra.mxu0 0.0
      %1289 = vmatpush.msra.mxu0 0.0
      %1290 = vmatpush.msra.mxu0 0.0
      %1291 = vmatpush.msra.mxu0 0.0
      %1292 = vmatpush.msra.mxu0 0.0
      %1293 = vmatpush.msra.mxu0 0.0
      %1294 = vmatpush.msra.mxu0 0.0
      %1295 = vmatpush.msra.mxu0 0.0
      %1296 = vmatpush.msra.mxu0 0.0
      %1297 = vmatpush.msra.mxu0 0.0
      %1298 = vmatpush.msra.mxu0 0.0
      %1299 = vmatpush.msra.mxu0 0.0
      %1300 = vmatpush.msra.mxu0 %v1277
      %1301 = vmatmul.f32.gmra.mxu0 %v1283
      %v1302 = vpop.f32.mrf.mxu0
      %v1303 = vadd.f32 0.0, %v1302
      %1304 = vdwg.mxu0
      %1305 = vmatpush.msra.mxu0 0.0
      %1306 = vmatpush.msra.mxu0 0.0
      %1307 = vmatpush.msra.mxu0 0.0
      %1308 = vmatpush.msra.mxu0 0.0
      %1309 = vmatpush.msra.mxu0 0.0
      %1310 = vmatpush.msra.mxu0 0.0
      %1311 = vmatpush.msra.mxu0 0.0
      %1312 = vmatpush.msra.mxu0 0.0
      %1313 = vmatpush.msra.mxu0 0.0
      %1314 = vmatpush.msra.mxu0 0.0
      %1315 = vmatpush.msra.mxu0 0.0
      %1316 = vmatpush.msra.mxu0 0.0
      %1317 = vmatpush.msra.mxu0 0.0
      %1318 = vmatpush.msra.mxu0 0.0
      %1319 = vmatpush.msra.mxu0 0.0
      %1320 = vmatpush.msra.mxu0 %v1278
      %1321 = vmatmul.f32.gmra.mxu0 %v1283
      %v1322 = vpop.f32.mrf.mxu0
      %v1323 = vadd.f32 0.0, %v1322
      %1324 = vdwg.mxu0
      %1325 = vmatpush.msra.mxu0 0.0
      %1326 = vmatpush.msra.mxu0 0.0
      %1327 = vmatpush.msra.mxu0 0.0
      %1328 = vmatpush.msra.mxu0 0.0
      %1329 = vmatpush.msra.mxu0 0.0
      %1330 = vmatpush.msra.mxu0 0.0
      %1331 = vmatpush.msra.mxu0 0.0
      %1332 = vmatpush.msra.mxu0 0.0
      %1333 = vmatpush.msra.mxu0 0.0
      %1334 = vmatpush.msra.mxu0 0.0
      %1335 = vmatpush.msra.mxu0 0.0
      %1336 = vmatpush.msra.mxu0 0.0
      %1337 = vmatpush.msra.mxu0 0.0
      %1338 = vmatpush.msra.mxu0 0.0
      %1339 = vmatpush.msra.mxu0 0.0
      %1340 = vmatpush.msra.mxu0 %v1275
      %1341 = vmatmul.f32.gmra.mxu0 %v1283
      %v1342 = vpop.f32.mrf.mxu0
      %v1343 = vadd.f32 0.0, %v1342
      %1344 = vdwg.mxu0
      %v1345 = vadd.f32 %v1265, %v1303
      %v1346 = vadd.f32 %v1266, %v1323
      %v1347 = vadd.f32 %v1267, %v1343
      %s1348 = scalar_lea.vmem %s2, 48
      %v1349 = vld [vmem:[%s1348] sm:$0xff]
      %1350 = vrot.lane.b32.xlu0 %v882, 92
      %v1351 = vpop.permute.xlu0 %1350
      %1352 = vrot.lane.b32.xlu0 %v883, 92
      %v1353 = vpop.permute.xlu0 %1352
      %1354 = vrot.lane.b32.xlu0 %v884, 92
      %v1355 = vpop.permute.xlu0 %1354
      %vm1356 = vcmask 752640
      %v1357 = vsel %vm1356, %v1351, %v1353
      %v1358 = vsel %vm1356, %v1353, %v1355
      %v1363 = vsel %vm275, %v1349, 0
      %1365 = vmatpush.msra.mxu0 0.0
      %1366 = vmatpush.msra.mxu0 0.0
      %1367 = vmatpush.msra.mxu0 0.0
      %1368 = vmatpush.msra.mxu0 0.0
      %1369 = vmatpush.msra.mxu0 0.0
      %1370 = vmatpush.msra.mxu0 0.0
      %1371 = vmatpush.msra.mxu0 0.0
      %1372 = vmatpush.msra.mxu0 0.0
      %1373 = vmatpush.msra.mxu0 0.0
      %1374 = vmatpush.msra.mxu0 0.0
      %1375 = vmatpush.msra.mxu0 0.0
      %1376 = vmatpush.msra.mxu0 0.0
      %1377 = vmatpush.msra.mxu0 0.0
      %1378 = vmatpush.msra.mxu0 0.0
      %1379 = vmatpush.msra.mxu0 0.0
      %1380 = vmatpush.msra.mxu0 %v1357
      %1381 = vmatmul.f32.gmra.mxu0 %v1363
      %v1382 = vpop.f32.mrf.mxu0
      %v1383 = vadd.f32 0.0, %v1382
      %1384 = vdwg.mxu0
      %1385 = vmatpush.msra.mxu0 0.0
      %1386 = vmatpush.msra.mxu0 0.0
      %1387 = vmatpush.msra.mxu0 0.0
      %1388 = vmatpush.msra.mxu0 0.0
      %1389 = vmatpush.msra.mxu0 0.0
      %1390 = vmatpush.msra.mxu0 0.0
      %1391 = vmatpush.msra.mxu0 0.0
      %1392 = vmatpush.msra.mxu0 0.0
      %1393 = vmatpush.msra.mxu0 0.0
      %1394 = vmatpush.msra.mxu0 0.0
      %1395 = vmatpush.msra.mxu0 0.0
      %1396 = vmatpush.msra.mxu0 0.0
      %1397 = vmatpush.msra.mxu0 0.0
      %1398 = vmatpush.msra.mxu0 0.0
      %1399 = vmatpush.msra.mxu0 0.0
      %1400 = vmatpush.msra.mxu0 %v1358
      %1401 = vmatmul.f32.gmra.mxu0 %v1363
      %v1402 = vpop.f32.mrf.mxu0
      %v1403 = vadd.f32 0.0, %v1402
      %1404 = vdwg.mxu0
      %1405 = vmatpush.msra.mxu0 0.0
      %1406 = vmatpush.msra.mxu0 0.0
      %1407 = vmatpush.msra.mxu0 0.0
      %1408 = vmatpush.msra.mxu0 0.0
      %1409 = vmatpush.msra.mxu0 0.0
      %1410 = vmatpush.msra.mxu0 0.0
      %1411 = vmatpush.msra.mxu0 0.0
      %1412 = vmatpush.msra.mxu0 0.0
      %1413 = vmatpush.msra.mxu0 0.0
      %1414 = vmatpush.msra.mxu0 0.0
      %1415 = vmatpush.msra.mxu0 0.0
      %1416 = vmatpush.msra.mxu0 0.0
      %1417 = vmatpush.msra.mxu0 0.0
      %1418 = vmatpush.msra.mxu0 0.0
      %1419 = vmatpush.msra.mxu0 0.0
      %1420 = vmatpush.msra.mxu0 %v1355
      %1421 = vmatmul.f32.gmra.mxu0 %v1363
      %v1422 = vpop.f32.mrf.mxu0
      %v1423 = vadd.f32 0.0, %v1422
      %1424 = vdwg.mxu0
      %v1425 = vadd.f32 %v1345, %v1383
      %v1426 = vadd.f32 %v1346, %v1403
      %v1427 = vadd.f32 %v1347, %v1423
      %s1428 = scalar_lea.vmem %s2, 56
      %v1429 = vld [vmem:[%s1428] sm:$0xff]
      %1430 = vrot.lane.b32.xlu0 %v882, 91
      %v1431 = vpop.permute.xlu0 %1430
      %1432 = vrot.lane.b32.xlu0 %v883, 91
      %v1433 = vpop.permute.xlu0 %1432
      %1434 = vrot.lane.b32.xlu0 %v884, 91
      %v1435 = vpop.permute.xlu0 %1434
      %vm1436 = vcmask 744448
      %v1437 = vsel %vm1436, %v1431, %v1433
      %v1438 = vsel %vm1436, %v1433, %v1435
      %v1443 = vsel %vm275, %v1429, 0
      %1445 = vmatpush.msra.mxu0 0.0
      %1446 = vmatpush.msra.mxu0 0.0
      %1447 = vmatpush.msra.mxu0 0.0
      %1448 = vmatpush.msra.mxu0 0.0
      %1449 = vmatpush.msra.mxu0 0.0
      %1450 = vmatpush.msra.mxu0 0.0
      %1451 = vmatpush.msra.mxu0 0.0
      %1452 = vmatpush.msra.mxu0 0.0
      %1453 = vmatpush.msra.mxu0 0.0
      %1454 = vmatpush.msra.mxu0 0.0
      %1455 = vmatpush.msra.mxu0 0.0
      %1456 = vmatpush.msra.mxu0 0.0
      %1457 = vmatpush.msra.mxu0 0.0
      %1458 = vmatpush.msra.mxu0 0.0
      %1459 = vmatpush.msra.mxu0 0.0
      %1460 = vmatpush.msra.mxu0 %v1437
      %1461 = vmatmul.f32.gmra.mxu0 %v1443
      %v1462 = vpop.f32.mrf.mxu0
      %v1463 = vadd.f32 0.0, %v1462
      %1464 = vdwg.mxu0
      %1465 = vmatpush.msra.mxu0 0.0
      %1466 = vmatpush.msra.mxu0 0.0
      %1467 = vmatpush.msra.mxu0 0.0
      %1468 = vmatpush.msra.mxu0 0.0
      %1469 = vmatpush.msra.mxu0 0.0
      %1470 = vmatpush.msra.mxu0 0.0
      %1471 = vmatpush.msra.mxu0 0.0
      %1472 = vmatpush.msra.mxu0 0.0
      %1473 = vmatpush.msra.mxu0 0.0
      %1474 = vmatpush.msra.mxu0 0.0
      %1475 = vmatpush.msra.mxu0 0.0
      %1476 = vmatpush.msra.mxu0 0.0
      %1477 = vmatpush.msra.mxu0 0.0
      %1478 = vmatpush.msra.mxu0 0.0
      %1479 = vmatpush.msra.mxu0 0.0
      %1480 = vmatpush.msra.mxu0 %v1438
      %1481 = vmatmul.f32.gmra.mxu0 %v1443
      %v1482 = vpop.f32.mrf.mxu0
      %v1483 = vadd.f32 0.0, %v1482
      %1484 = vdwg.mxu0
      %1485 = vmatpush.msra.mxu0 0.0
      %1486 = vmatpush.msra.mxu0 0.0
      %1487 = vmatpush.msra.mxu0 0.0
      %1488 = vmatpush.msra.mxu0 0.0
      %1489 = vmatpush.msra.mxu0 0.0
      %1490 = vmatpush.msra.mxu0 0.0
      %1491 = vmatpush.msra.mxu0 0.0
      %1492 = vmatpush.msra.mxu0 0.0
      %1493 = vmatpush.msra.mxu0 0.0
      %1494 = vmatpush.msra.mxu0 0.0
      %1495 = vmatpush.msra.mxu0 0.0
      %1496 = vmatpush.msra.mxu0 0.0
      %1497 = vmatpush.msra.mxu0 0.0
      %1498 = vmatpush.msra.mxu0 0.0
      %1499 = vmatpush.msra.mxu0 0.0
      %1500 = vmatpush.msra.mxu0 %v1435
      %1501 = vmatmul.f32.gmra.mxu0 %v1443
      %v1502 = vpop.f32.mrf.mxu0
      %v1503 = vadd.f32 0.0, %v1502
      %1504 = vdwg.mxu0
      %v1505 = vadd.f32 %v1425, %v1463
      %v1506 = vadd.f32 %v1426, %v1483
      %v1507 = vadd.f32 %v1427, %v1503
      %s1508 = scalar_lea.vmem %s2, 64
      %v1509 = vld [vmem:[%s1508] sm:$0xff]
      %1510 = vrot.lane.b32.xlu0 %v882, 90
      %v1511 = vpop.permute.xlu0 %1510
      %1512 = vrot.lane.b32.xlu0 %v883, 90
      %v1513 = vpop.permute.xlu0 %1512
      %1514 = vrot.lane.b32.xlu0 %v884, 90
      %v1515 = vpop.permute.xlu0 %1514
      %vm1516 = vcmask 736256
      %v1517 = vsel %vm1516, %v1511, %v1513
      %v1518 = vsel %vm1516, %v1513, %v1515
      %v1523 = vsel %vm275, %v1509, 0
      %1525 = vmatpush.msra.mxu0 0.0
      %1526 = vmatpush.msra.mxu0 0.0
      %1527 = vmatpush.msra.mxu0 0.0
      %1528 = vmatpush.msra.mxu0 0.0
      %1529 = vmatpush.msra.mxu0 0.0
      %1530 = vmatpush.msra.mxu0 0.0
      %1531 = vmatpush.msra.mxu0 0.0
      %1532 = vmatpush.msra.mxu0 0.0
      %1533 = vmatpush.msra.mxu0 0.0
      %1534 = vmatpush.msra.mxu0 0.0
      %1535 = vmatpush.msra.mxu0 0.0
      %1536 = vmatpush.msra.mxu0 0.0
      %1537 = vmatpush.msra.mxu0 0.0
      %1538 = vmatpush.msra.mxu0 0.0
      %1539 = vmatpush.msra.mxu0 0.0
      %1540 = vmatpush.msra.mxu0 %v1517
      %1541 = vmatmul.f32.gmra.mxu0 %v1523
      %v1542 = vpop.f32.mrf.mxu0
      %v1543 = vadd.f32 0.0, %v1542
      %1544 = vdwg.mxu0
      %1545 = vmatpush.msra.mxu0 0.0
      %1546 = vmatpush.msra.mxu0 0.0
      %1547 = vmatpush.msra.mxu0 0.0
      %1548 = vmatpush.msra.mxu0 0.0
      %1549 = vmatpush.msra.mxu0 0.0
      %1550 = vmatpush.msra.mxu0 0.0
      %1551 = vmatpush.msra.mxu0 0.0
      %1552 = vmatpush.msra.mxu0 0.0
      %1553 = vmatpush.msra.mxu0 0.0
      %1554 = vmatpush.msra.mxu0 0.0
      %1555 = vmatpush.msra.mxu0 0.0
      %1556 = vmatpush.msra.mxu0 0.0
      %1557 = vmatpush.msra.mxu0 0.0
      %1558 = vmatpush.msra.mxu0 0.0
      %1559 = vmatpush.msra.mxu0 0.0
      %1560 = vmatpush.msra.mxu0 %v1518
      %1561 = vmatmul.f32.gmra.mxu0 %v1523
      %v1562 = vpop.f32.mrf.mxu0
      %v1563 = vadd.f32 0.0, %v1562
      %1564 = vdwg.mxu0
      %1565 = vmatpush.msra.mxu0 0.0
      %1566 = vmatpush.msra.mxu0 0.0
      %1567 = vmatpush.msra.mxu0 0.0
      %1568 = vmatpush.msra.mxu0 0.0
      %1569 = vmatpush.msra.mxu0 0.0
      %1570 = vmatpush.msra.mxu0 0.0
      %1571 = vmatpush.msra.mxu0 0.0
      %1572 = vmatpush.msra.mxu0 0.0
      %1573 = vmatpush.msra.mxu0 0.0
      %1574 = vmatpush.msra.mxu0 0.0
      %1575 = vmatpush.msra.mxu0 0.0
      %1576 = vmatpush.msra.mxu0 0.0
      %1577 = vmatpush.msra.mxu0 0.0
      %1578 = vmatpush.msra.mxu0 0.0
      %1579 = vmatpush.msra.mxu0 0.0
      %1580 = vmatpush.msra.mxu0 %v1515
      %1581 = vmatmul.f32.gmra.mxu0 %v1523
      %v1582 = vpop.f32.mrf.mxu0
      %v1583 = vadd.f32 0.0, %v1582
      %1584 = vdwg.mxu0
      %v1585 = vadd.f32 %v1505, %v1543
      %v1586 = vadd.f32 %v1506, %v1563
      %v1587 = vadd.f32 %v1507, %v1583
      %v1588 = vld [vmem:[%s246] sm:$0xff]
      %v1589 = vld [vmem:[%s246 + $0x8] sm:$0xf]
      %v1590 = vunpack.c.l.bf16 %v1588
      %v1591 = vunpack.c.h.bf16 %v1588
      %v1592 = vunpack.c.l.bf16 %v1589
      %v1593 = vld [vmem:[%s4] sm:$0xff]
      %1595 = vset.pattern.permute.xlu0 0
      %1596 = vperm.xlu0 %1595, %v1593
      %v1597 = vpop.permute.xlu0 %1596
      %v1599 = vadd.f32 %v1585, %v1597
      %v1600 = vadd.f32 %v1586, %v1597
      %v1601 = vadd.f32 %v1587, %v1597
      %1605 = vrot.lane.b32.xlu0 %v1590, 109
      %v1606 = vpop.permute.xlu0 %1605
      %1607 = vrot.lane.b32.xlu0 %v1591, 109
      %v1608 = vpop.permute.xlu0 %1607
      %1609 = vrot.lane.b32.xlu0 %v1592, 109
      %v1610 = vpop.permute.xlu0 %1609
      %v1611 = vsel %vm1196, %v1606, %v1608
      %v1612 = vsel %vm1196, %v1608, %v1610
      %v1616 = vadd.f32 %v1599, %v1611
      %v1617 = vadd.f32 %v1600, %v1612
      %v1618 = vadd.f32 %v1601, %v1610
      %v1619 = vmax.f32 %v1616, 0.0
      %v1620 = vmax.f32 %v1617, 0.0
      %v1621 = vmax.f32 %v1618, 0.0
      %1622 = vst [vmem:[%s251] sm:$0xff] %v1619
      %1623 = vst [vmem:[%s251 + $0x8] sm:$0xff] %v1620
      %vm1624 = vcmask 261120
      %1625 = vst.msk [vmem:[%s251 + $0x10] sm:$0xff] %vm1624, %v1621
      %p1626 = scmp.lt.s32.totalorder %s17, 1
      %s1627 = scalar_select %p1626, %s17, 1
      %s1628 = smul.addr %s1627, 3
      %s1629 = smul.addr %s1628, 8
      %s1630 = scalar_lea.vmem %s6, %s1629
      // Predicated region
      $region45: #{basic_block_forward.1} parent=43 // pred_check
        %p1631 = pneg %p166
      $region46: #{basic_block_forward.1} parent=43 // pred_check_branch
        %1633 = sbr.rel (%p1631) target = $region48
      $region47: #{basic_block_forward.1} parent=43 // pred_region
        _
      $region48: #{basic_block_forward.1} parent=43 // pred_fallthru
        _
    $region44: #{basic_block_forward.1} parent=5 // pred_fallthru
      _
    %p1634 = scmp.le.s32.totalorder 2, %s12
    // Predicated region
    $region49: #{basic_block_forward.1} parent=5 // pred_check
      %p1635 = pneg %p1634
    $region50: #{basic_block_forward.1} parent=5 // pred_check_branch
      %1637 = sbr.rel (%p1635) target = $region52
    $region51: #{basic_block_forward.1} parent=5 // pred_region
      %s1638 = ssub.s32 %s12, 2
      // Predicated region
      $region53: #{basic_block_forward.1} parent=51 // pred_check
        %p1639 = pneg %p172
      $region54: #{basic_block_forward.1} parent=51 // pred_check_branch
        %1641 = sbr.rel (%p1639) target = $region56
      $region55: #{basic_block_forward.1} parent=51 // pred_region
        %p1642 = scmp.lt.s32.totalorder %s18, 1
        %s1643 = scalar_select %p1642, %s18, 1
        %s1644 = smul.addr %s1643, 3
        %s1645 = smul.addr %s1644, 8
        %s1646 = scalar_lea.vmem %s6, %s1645
      $region56: #{basic_block_forward.1} parent=51 // pred_fallthru
        _
    $region52: #{basic_block_forward.1} parent=5 // pred_fallthru
      _
  $region6: #{basic_block_forward.1} parent=0 // loop_footer
    %s16 = sadd.s32 1, %s12
  $region7: #{basic_block_forward.1} parent=0 // loop_footer_branch
    %11 = sbr.rel target = $region3
  $region8: #{basic_block_forward.1} parent=0 // loop_exit
    _

</llo_original>
